<compile_context>
chip_gen: v7x
topology: tpu7x:2x2x1
jax: 0.10.0
libtpu: 0.0.40
codegen_flags: <defaults>
</compile_context>

<pallas_src>
import functools

import jax
import jax.numpy as jnp
from jax.experimental import pallas as pl
from jax.experimental.pallas import tpu as pltpu

NUM_CLASSES = 24
NPAD = 128  # class axis padded to one full lane width


def _feature_map_kernel(data_ref, label_ref, colpool_ref,
                        feat_ref, mask_ref, acc_ref,
                        *, C, T_h, fh, fw, W, w):
    # data_ref   : (1, T_h, C+1, w)  f32   low-res data tile, ones channel last
    # label_ref  : (1, T_H, W)       int32 high-res label tile (lane-dense)
    # colpool_ref: (W, w)            f32   static X -> x pooling matrix
    # feat_ref   : (1, C, NPAD)      f32
    # mask_ref   : (1, 1, NPAD)      f32
    # acc_ref    : (C+1, NPAD)       f32   scratch accumulator (row C = counts)
    T_H = T_h * fh
    t = pl.program_id(1)

    @pl.when(t == 0)
    def _init():
        acc_ref[...] = jnp.zeros_like(acc_ref)

    lab = label_ref[0]                                        # (T_H, W) int32

    # One-hot with classes on the sublane axis, W on lanes (lane-dense for
    # real image widths).  Ignore label (-1) matches no class -> zero row.
    classes = jax.lax.broadcasted_iota(jnp.int32, (T_H, NPAD, W), 1)
    oh = (lab[:, None, :] == classes).astype(jnp.float32)     # (T_H, NPAD, W)

    # Pool high-res columns X -> low-res columns x (single 2-D MXU matmul).
    if fw == 1:
        cp = oh                                               # (T_H, NPAD, w)
    else:
        oh2 = oh.reshape(T_H * NPAD, W)                       # free merge
        cp2 = jnp.dot(oh2, colpool_ref[...],
                      preferred_element_type=jnp.float32)     # (T_H*NPAD, w)
        cp = cp2.reshape(T_H, NPAD, w)                        # free split

    # Pool high-res rows -> low-res rows (contiguous groups of fh).
    if fh == 1:
        pooled = cp                                           # (T_h, NPAD, w)
    else:
        pooled = jnp.sum(cp.reshape(T_h, fh, NPAD, w), axis=1)

    # Contract with the low-res data tile; the appended ones channel makes the
    # last output channel the per-class pixel count contribution.
    d = data_ref[0]                                           # (T_h, C+1, w)
    contrib = jnp.einsum('ycx,ynx->ycn', d, pooled,
                         preferred_element_type=jnp.float32)  # (T_h, C+1, NPAD)
    acc_ref[...] += jnp.sum(contrib, axis=0)

    @pl.when(t == pl.num_programs(1) - 1)
    def _finalize():
        acc = acc_ref[...]
        cnt = acc[C:C + 1, :]                                 # (1, NPAD)
        # One reciprocal on the count vector + broadcast multiply.
        # (pl.reciprocal(..., approx=True) is a further EUP win if a ~1e-4
        #  relative tolerance is acceptable.)
        inv = pl.reciprocal(cnt + 1e-8)
        feat_ref[0] = acc[:C, :] * inv
        mask_ref[0] = (cnt > 0).astype(jnp.float32)


def _pick_tile_rows(h, fh, W, budget_bytes=2 << 20):
    """Largest low-res row tile whose one-hot tile fits the VMEM budget."""
    lanes = max(W, 128)
    best = None
    for T_h in range(h, 0, -1):
        if h % T_h:
            continue
        T_H = T_h * fh
        if T_H != h * fh and T_H % 8 != 0:   # label block sublane constraint
            continue
        best = T_h                           # smallest valid so far (fallback)
        if T_H * NPAD * lanes * 4 <= budget_bytes:
            return T_h
    return best if best is not None else h


def feature_map(data, label, *, tile_rows=None):
    """data: (B, C, h, w) float32, label: (B, H, W) int in [-1, 23]."""
    data = data.astype(jnp.float32)
    label = label.astype(jnp.int32)
    B, C, h, w = data.shape
    Bl, H, W = label.shape
    assert B == Bl

    if H % h != 0 or W % w != 0:
        # TODO(synk): non-integer nearest-neighbor factors take a slow path
        # that gathers data to label resolution in the wrapper (extra HBM
        # traffic); the fast path below handles the common integer-factor case
        # without ever materializing the upsampled tensor.
        hi = (jnp.arange(H) * h) // H
        wi = (jnp.arange(W) * w) // W
        data = data[:, :, hi[:, None], wi[None, :]]
        h, w = H, W
    fh, fw = H // h, W // w

    # Channel axis moved next to the width axis + a ones channel whose matmul
    # output row is the per-class pixel count (counts fused into the MXU op).
    data_t = jnp.transpose(data, (0, 2, 1, 3))                # (B, h, C, w)
    ones = jnp.ones((B, h, 1, w), jnp.float32)
    data_aug = jnp.concatenate([data_t, ones], axis=2)        # (B, h, C+1, w)

    # Static column-pooling matrix: colpool[X, x] = 1 iff X // fw == x.
    colpool = (jnp.arange(W)[:, None] // fw ==
               jnp.arange(w)[None, :]).astype(jnp.float32)    # (W, w)

    T_h = _pick_tile_rows(h, fh, W) if tile_rows is None else tile_rows
    assert h % T_h == 0
    T_H = T_h * fh
    assert T_H == H or T_H % 8 == 0
    n_tiles = h // T_h

    kernel = functools.partial(_feature_map_kernel,
                               C=C, T_h=T_h, fh=fh, fw=fw, W=W, w=w)

    feat_pad, mask_pad = pl.pallas_call(
        kernel,
        out_shape=(
            jax.ShapeDtypeStruct((B, C, NPAD), jnp.float32),
            jax.ShapeDtypeStruct((B, 1, NPAD), jnp.float32),
        ),
        grid_spec=pltpu.PrefetchScalarGridSpec(
            num_scalar_prefetch=0,
            grid=(B, n_tiles),
            in_specs=[
                pl.BlockSpec((1, T_h, C + 1, w), lambda b, t: (b, t, 0, 0)),
                pl.BlockSpec((1, T_H, W), lambda b, t: (b, t, 0)),
                pl.BlockSpec((W, w), lambda b, t: (0, 0)),
            ],
            out_specs=[
                pl.BlockSpec((1, C, NPAD), lambda b, t: (b, 0, 0)),
                pl.BlockSpec((1, 1, NPAD), lambda b, t: (b, 0, 0)),
            ],
            scratch_shapes=[pltpu.VMEM((C + 1, NPAD), jnp.float32)],
        ),
        compiler_params=pltpu.CompilerParams(
            dimension_semantics=("parallel", "arbitrary"),
            vmem_limit_bytes=32 * 1024 * 1024,
        ),
    )(data_aug, label, colpool)

    feature = feat_pad[:, :, :NUM_CLASSES]        # (B, C, 24)
    mask = mask_pad[:, 0, :NUM_CLASSES]           # (B, 24)
    return feature, mask


def feature_map_ref(data, label):
    """Plain-JAX reference mirroring the PyTorch forward exactly."""
    B, C, h, w = data.shape
    _, H, W = label.shape
    hi = (jnp.arange(H) * h) // H
    wi = (jnp.arange(W) * w) // W
    data_up = data[:, :, hi[:, None], wi[None, :]]
    valid = label != -1
    lab = jnp.where(valid, label, 0)
    oh = jax.nn.one_hot(lab, NUM_CLASSES, dtype=jnp.float32)
    oh = oh * valid[..., None].astype(jnp.float32)            # (B, H, W, N)
    feat = jnp.einsum('bchw,bhwn->bcn', data_up, oh)
    cnt = oh.sum(axis=(1, 2))[:, None, :]                     # (B, 1, N)
    feat = feat / (cnt + 1e-8)
    mask = (oh.mean(axis=(1, 2)) > 0).astype(jnp.float32)     # (B, N)
    return feat, mask


if __name__ == "__main__":
    key = jax.random.PRNGKey(0)
    kd, kl = jax.random.split(key)

    B, C, h, w = 2, 4, 8, 8      # data at low resolution (NCHW)
    H, W = 16, 16                # label resolution (2x nearest upsample)

    data = jax.random.normal(kd, (B, C, h, w), dtype=jnp.float32)
    label = jax.random.randint(kl, (B, H, W), -1, NUM_CLASSES, dtype=jnp.int32)

    feat_ref, mask_ref = feature_map_ref(data, label)

    # Multi-tile path (exercises the accumulator / pl.when init+finalize).
    feature, mask = feature_map(data, label, tile_rows=4)
    feature = jax.block_until_ready(feature)
    mask = jax.block_until_ready(mask)
    assert feature.shape == (B, C, NUM_CLASSES)
    assert mask.shape == (B, NUM_CLASSES)
    assert jnp.allclose(feature, feat_ref, atol=1e-4, rtol=1e-4)
    assert jnp.allclose(mask, mask_ref)

    # Default (auto) tile selection.
    feature2, mask2 = feature_map(data, label)
    feature2 = jax.block_until_ready(feature2)
    mask2 = jax.block_until_ready(mask2)
    assert jnp.allclose(feature2, feat_ref, atol=1e-4, rtol=1e-4)
    assert jnp.allclose(mask2, mask_ref)

    print("KERNEL_OK")
</pallas_src>

<mosaic_0001>
module attributes {stable_mosaic.version = 11 : i64} {
  func.func @_feature_map_kernel(%arg0: i32, %arg1: i32, %arg2: memref<1x4x5x8xf32, #tpu.memory_space<vmem>>, %arg3: memref<1x8x16xi32, #tpu.memory_space<vmem>>, %arg4: memref<16x8xf32, #tpu.memory_space<vmem>>, %arg5: memref<1x4x128xf32, #tpu.memory_space<vmem>>, %arg6: memref<1x1x128xf32, #tpu.memory_space<vmem>>, %arg7: memref<5x128xf32, #tpu.memory_space<vmem>>) attributes {dimension_semantics = [#tpu.dimension_semantics<parallel>, #tpu.dimension_semantics<arbitrary>], iteration_bounds = array<i64: 2, 2>, scalar_prefetch = 0 : i64, scratch_operands = 1 : i64, tpu.core_type = #tpu.core_type<tc>, window_params = [{transform_indices = @transform_0, window_bounds = array<i64: 1, 4, 5, 8>}, {transform_indices = @transform_1, window_bounds = array<i64: 1, 8, 16>}, {pipeline_mode = #tpu.pipeline_mode<synchronous>, transform_indices = @transform_2, window_bounds = array<i64: 16, 8>}, {transform_indices = @transform_3, window_bounds = array<i64: 1, 4, 128>}, {transform_indices = @transform_4, window_bounds = array<i64: 1, 1, 128>}]} {
    %c0_i32 = arith.constant 0 : i32
    %0 = arith.cmpi eq, %arg1, %c0_i32 : i32
    %1 = arith.extui %0 : i1 to i32
    %c0_i32_0 = arith.constant 0 : i32
    %2 = arith.cmpi ne, %1, %c0_i32_0 : i32
    scf.if %2 {
      %cst_17 = arith.constant 0.000000e+00 : f32
      %27 = vector.broadcast %cst_17 : f32 to vector<5x128xf32>
      %c0_18 = arith.constant 0 : index
      %c0_19 = arith.constant 0 : index
      %28 = vector.load %arg7[%c0_18, %c0_19] : memref<5x128xf32, #tpu.memory_space<vmem>>, vector<5x128xf32>
      tpu.vector_store %arg7[%c0_18, %c0_19], %27 {strides = array<i32>} : memref<5x128xf32, #tpu.memory_space<vmem>>, vector<5x128xf32>,
    } else {
    }
    %c0 = arith.constant 0 : index
    %c0_1 = arith.constant 0 : index
    %c0_2 = arith.constant 0 : index
    %3 = vector.load %arg3[%c0, %c0_1, %c0_2] : memref<1x8x16xi32, #tpu.memory_space<vmem>>, vector<1x8x16xi32>
    %4 = vector.shape_cast %3 : vector<1x8x16xi32> to vector<8x16xi32>
    %5 = tpu.iota {dimensions = array<i32: 1>} : vector<8x128x16xi32>
    %6 = vector.shape_cast %4 : vector<8x16xi32> to vector<8x1x16xi32>
    %7 = vector.broadcast %6 : vector<8x1x16xi32> to vector<8x128x16xi32>
    %8 = arith.cmpi eq, %7, %5 : vector<8x128x16xi32>
    %9 = arith.extui %8 : vector<8x128x16xi1> to vector<8x128x16xi32>
    %10 = arith.sitofp %9 : vector<8x128x16xi32> to vector<8x128x16xf32>
    %11 = vector.shape_cast %10 : vector<8x128x16xf32> to vector<1024x16xf32>
    %c0_3 = arith.constant 0 : index
    %c0_4 = arith.constant 0 : index
    %12 = vector.load %arg4[%c0_3, %c0_4] : memref<16x8xf32, #tpu.memory_space<vmem>>, vector<16x8xf32>
    %cst = arith.constant dense<0.000000e+00> : vector<1024x8xf32>
    %13 = tpu.matmul %11, %12, %cst {dimension_numbers = #tpu.dot_dimension_numbers<[1], [0], [0], [1], [0, 0, 1, 1], [], []>} : vector<1024x16xf32>, vector<16x8xf32>, vector<1024x8xf32> -> vector<1024x8xf32>
    %14 = vector.shape_cast %13 : vector<1024x8xf32> to vector<8x128x8xf32>
    %15 = vector.shape_cast %14 : vector<8x128x8xf32> to vector<4x2x128x8xf32>
    %cst_5 = arith.constant dense<0.000000e+00> : vector<4x128x8xf32>
    %16 = vector.multi_reduction <add>, %15, %cst_5 [1] : vector<4x2x128x8xf32> to vector<4x128x8xf32>
    %c0_6 = arith.constant 0 : index
    %c0_7 = arith.constant 0 : index
    %c0_8 = arith.constant 0 : index
    %c0_9 = arith.constant 0 : index
    %17 = vector.load %arg2[%c0_6, %c0_7, %c0_8, %c0_9] : memref<1x4x5x8xf32, #tpu.memory_space<vmem>>, vector<1x4x5x8xf32>
    %18 = vector.shape_cast %17 : vector<1x4x5x8xf32> to vector<4x5x8xf32>
    "tpu.trace_start"() <{level = 10 : i32, message = "ycx,ynx->ycn"}> : () -> ()
    %cst_10 = arith.constant dense<0.000000e+00> : vector<4x5x128xf32>
    %19 = tpu.matmul %18, %16, %cst_10 {dimension_numbers = #tpu.dot_dimension_numbers<[2], [2], [1], [1], [0, 0, 0, 1, 1, 1], [0], [0]>} : vector<4x5x8xf32>, vector<4x128x8xf32>, vector<4x5x128xf32> -> vector<4x5x128xf32>
    "tpu.trace_stop"() : () -> ()
    %c0_11 = arith.constant 0 : index
    %c0_12 = arith.constant 0 : index
    %20 = vector.load %arg7[%c0_11, %c0_12] : memref<5x128xf32, #tpu.memory_space<vmem>>, vector<5x128xf32>
    %cst_13 = arith.constant dense<0.000000e+00> : vector<5x128xf32>
    %21 = vector.multi_reduction <add>, %19, %cst_13 [0] : vector<4x5x128xf32> to vector<5x128xf32>
    %22 = arith.addf %20, %21 : vector<5x128xf32>
    %c0_14 = arith.constant 0 : index
    %c0_15 = arith.constant 0 : index
    %23 = vector.load %arg7[%c0_14, %c0_15] : memref<5x128xf32, #tpu.memory_space<vmem>>, vector<5x128xf32>
    tpu.vector_store %arg7[%c0_14, %c0_15], %22 {strides = array<i32>} : memref<5x128xf32, #tpu.memory_space<vmem>>, vector<5x128xf32>,
    %c1_i32 = arith.constant 1 : i32
    %24 = arith.cmpi eq, %arg1, %c1_i32 : i32
    %25 = arith.extui %24 : i1 to i32
    %c0_i32_16 = arith.constant 0 : i32
    %26 = arith.cmpi ne, %25, %c0_i32_16 : i32
    scf.if %26 {
      %c0_17 = arith.constant 0 : index
      %c0_18 = arith.constant 0 : index
      %27 = vector.load %arg7[%c0_17, %c0_18] : memref<5x128xf32, #tpu.memory_space<vmem>>, vector<5x128xf32>
      %28 = vector.extract_strided_slice %27 {offsets = [4, 0], sizes = [1, 128], strides = [1, 1]} : vector<5x128xf32> to vector<1x128xf32>
      %cst_19 = arith.constant 9.99999993E-9 : f32
      %29 = vector.broadcast %cst_19 : f32 to vector<1x128xf32>
      %30 = arith.addf %28, %29 : vector<1x128xf32>
      %31 = tpu.reciprocal %30 : vector<1x128xf32> -> vector<1x128xf32>
      %32 = vector.extract_strided_slice %27 {offsets = [0, 0], sizes = [4, 128], strides = [1, 1]} : vector<5x128xf32> to vector<4x128xf32>
      %33 = vector.broadcast %31 : vector<1x128xf32> to vector<4x128xf32>
      %34 = arith.mulf %32, %33 : vector<4x128xf32>
      %c0_20 = arith.constant 0 : index
      %c0_21 = arith.constant 0 : index
      %c0_22 = arith.constant 0 : index
      %35 = vector.load %arg5[%c0_20, %c0_21, %c0_22] : memref<1x4x128xf32, #tpu.memory_space<vmem>>, vector<1x4x128xf32>
      %36 = vector.shape_cast %35 : vector<1x4x128xf32> to vector<4x128xf32>
      %37 = vector.shape_cast %34 : vector<4x128xf32> to vector<1x4x128xf32>
      tpu.vector_store %arg5[%c0_20, %c0_21, %c0_22], %37 {strides = array<i32>} : memref<1x4x128xf32, #tpu.memory_space<vmem>>, vector<1x4x128xf32>,
      %cst_23 = arith.constant 0.000000e+00 : f32
      %38 = vector.broadcast %cst_23 : f32 to vector<1x128xf32>
      %39 = arith.cmpf ogt, %28, %38 : vector<1x128xf32>
      %40 = arith.extui %39 : vector<1x128xi1> to vector<1x128xi32>
      %41 = arith.sitofp %40 : vector<1x128xi32> to vector<1x128xf32>
      %c0_24 = arith.constant 0 : index
      %c0_25 = arith.constant 0 : index
      %c0_26 = arith.constant 0 : index
      %42 = vector.load %arg6[%c0_24, %c0_25, %c0_26] : memref<1x1x128xf32, #tpu.memory_space<vmem>>, vector<1x1x128xf32>
      %43 = vector.shape_cast %42 : vector<1x1x128xf32> to vector<1x128xf32>
      %44 = vector.shape_cast %41 : vector<1x128xf32> to vector<1x1x128xf32>
      tpu.vector_store %arg6[%c0_24, %c0_25, %c0_26], %44 {strides = array<i32>} : memref<1x1x128xf32, #tpu.memory_space<vmem>>, vector<1x1x128xf32>,
    } else {
    }
    return
  }
  func.func @transform_0(%arg0: i32, %arg1: i32) -> (i32, i32, i32, i32) {
    %c0_i32 = arith.constant 0 : i32
    %c0_i32_0 = arith.constant 0 : i32
    %c0_i32_1 = arith.constant 0 : i32
    return %arg0, %arg1, %c0_i32, %c0_i32_0 : i32, i32, i32, i32
  }
  func.func @transform_1(%arg0: i32, %arg1: i32) -> (i32, i32, i32) {
    %c0_i32 = arith.constant 0 : i32
    %c0_i32_0 = arith.constant 0 : i32
    return %arg0, %arg1, %c0_i32 : i32, i32, i32
  }
  func.func @transform_2(%arg0: i32, %arg1: i32) -> (i32, i32) {
    %c0_i32 = arith.constant 0 : i32
    %c0_i32_0 = arith.constant 0 : i32
    %c0_i32_1 = arith.constant 0 : i32
    return %c0_i32, %c0_i32_0 : i32, i32
  }
  func.func @transform_3(%arg0: i32, %arg1: i32) -> (i32, i32, i32) {
    %c0_i32 = arith.constant 0 : i32
    %c0_i32_0 = arith.constant 0 : i32
    %c0_i32_1 = arith.constant 0 : i32
    return %arg0, %c0_i32, %c0_i32_0 : i32, i32, i32
  }
  func.func @transform_4(%arg0: i32, %arg1: i32) -> (i32, i32, i32) {
    %c0_i32 = arith.constant 0 : i32
    %c0_i32_0 = arith.constant 0 : i32
    %c0_i32_1 = arith.constant 0 : i32
    return %arg0, %c0_i32, %c0_i32_0 : i32, i32, i32
  }
}

</mosaic_0001>

<llo_original>
// kernel: tpu_custom_call.1
$region0: #{tpu_custom_call.1}
  #allocation0 [shape = 'u32[]', space=smem, size = 0x4, offset = 0x4, fixed_abs, tag = 'smem constant byte address 0x4 - core index']
  #allocation1 [shape = 'u32[144,128]{1,0:T(1,128)}', space=vmem, size = 0x12000, scoped, tag = 'internal scratch']
  #allocation2 [shape = 'f32[5,128]{1,0:T(8,128)}', space=vmem, size = 0x1000, scoped, tag = 'scratch operand']
  %s0 = inlined_call_operand.vmem [shape: f32[2,8,5,8], index: 0, kind: input, shape index: {}]
  %s1 = inlined_call_operand.vmem [shape: s32[2,16,16], index: 1, kind: input, shape index: {}]
  %s2 = inlined_call_operand.vmem [shape: f32[16,8], index: 2, kind: input, shape index: {}]
  %s3 = inlined_call_operand.hbm [shape: f32[2,4,128], index: 3, kind: output, shape index: {0}]
  %s4 = inlined_call_operand.hbm [shape: f32[2,1,128], index: 4, kind: output, shape index: {1}]
  %5 = xla_tuple %s3, %s4
  %s6 = sld [smem:[#allocation0]]
  $region61: #{tpu_custom_call.1} parent=0
    _
  %s8 = ssub.s32 1, %s6
  %s9 = scalar_select 0, %s8, %s6
  $region1: #{tpu_custom_call.1} parent=0
    #allocation3 [shape = 'u8[4096]{0}', space=vmem, size = 0x1000, scoped, tag = 'output window, operand 0']
    #allocation4 [shape = 's32[2]{0}', space=sflag, size = 0x8, scoped, tag = 'scoped memory for tpu_custom_call.1']
    #allocation5 [shape = 'u8[1024]{0}', space=vmem, size = 0x400, scoped, tag = 'output window, operand 1']
    #allocation6 [shape = 's32[2]{0}', space=sflag, size = 0x8, scoped, tag = 'scoped memory for tpu_custom_call.1']
    %10 = vsyncpa [#allocation4], 0
    %s11 = scalar_lea.sflag [#allocation4], 1
    %12 = vsyncpa %s11, 0
    %13 = vsyncpa [#allocation6], 0
    %s14 = scalar_lea.sflag [#allocation6], 1
    %15 = vsyncpa %s14, 0
    loop: start=0, step=1, limit=6
    $region2: #{tpu_custom_call.1} parent=1 // loop_pre_header
      _
    $region3: #{tpu_custom_call.1} parent=1 // loop_header
      %s17 = sphi 0, %s21
      %p18 = scmp.ge.s32.totalorder %s17, 6
      %s24 = sphi 0, %s36
      %s25 = sphi 0, %s32
      %s26 = sphi 0, %s24
      %s27 = sphi 0, %s25
      %s28 = sphi 0, %s26
      %s29 = sphi 0, %s27
      %s41 = sphi 0, %s43
      %s44 = sphi 0, %s41
      %s45 = sphi 0, %s44
      %s61 = sphi 0, %s45
      %s69 = sphi 0, %s71
      %s72 = sphi 0, %s69
      %s73 = sphi 0, %s72
      %s89 = sphi 0, %s73
      %s93 = sphi 0, %s93
      %s95 = sphi 0, %s93
      %s96 = sphi 0, %s95
      %s110 = sphi 0, %s96
      %s116 = sphi 0, %s118
      %s119 = sphi 0, %s116
      %s120 = sphi 0, %s119
      %s136 = sphi 0, %s120
      %s142 = sphi 0, %s144
      %s145 = sphi 0, %s142
      %s146 = sphi 0, %s145
      %s162 = sphi 0, %s146
    $region4: #{tpu_custom_call.1} parent=1 // loop_header_branch
      %20 = sbr.rel (%p18) target = $region8
    $region5: #{tpu_custom_call.1} parent=1 // loop_body
      %s22 = ssub.s32 %s17, 1
      %s23 = ssub.s32 %s17, 2
      %s30 = sadd.s32 1, %s25
      %p31 = scmp.ge.s32.totalorder %s30, 2
      %s32 = scalar_select %p31, 0, %s30
      %s33 = sadd.s32 1, %s24
      %s34 = scalar_select %p31, %s33, %s24
      %p35 = scmp.ge.s32.totalorder %s34, 2
      %s36 = scalar_select %p35, 0, %s34
      %s37 = ssub.s32 %s24, %s36
      %s38 = ssub.s32 %s25, %s32
      %s39 = sor.u32 %s37, %s38
      %p40 = scmp.eq.s32.totalorder %s39, 0
      %s42 = sadd.s32 %s41, 1
      %s43 = scalar_select %p40, %s41, %s42
      %p46 = pneg %p40
      %p47 = scmp.eq.s32.totalorder %s17, 3
      %p48 = por %p46, %p47
      %p49 = scmp.ne.s32.totalorder %s41, %s44
      %p50 = scmp.eq.s32.totalorder %s17, 0
      %p51 = por %p49, %p50
      %p52 = scmp.ne.s32.totalorder %s41, %s44
      %p53 = scmp.eq.s32.totalorder %s22, 3
      %p54 = por %p52, %p53
      %p55 = scmp.ne.s32.totalorder %s44, %s45
      %p56 = scmp.eq.s32.totalorder %s22, 0
      %p57 = por %p55, %p56
      %p58 = scmp.ne.s32.totalorder %s44, %s45
      %p59 = scmp.eq.s32.totalorder %s23, 3
      %p60 = por %p58, %p59
      %p62 = scmp.ne.s32.totalorder %s45, %s61
      %p63 = scmp.eq.s32.totalorder %s23, 0
      %p64 = por %p62, %p63
      %s65 = ssub.s32 %s24, %s36
      %s66 = ssub.s32 %s25, %s32
      %s67 = sor.u32 %s65, %s66
      %p68 = scmp.eq.s32.totalorder %s67, 0
      %s70 = sadd.s32 %s69, 1
      %s71 = scalar_select %p68, %s69, %s70
      %p74 = pneg %p68
      %p75 = scmp.eq.s32.totalorder %s17, 3
      %p76 = por %p74, %p75
      %p77 = scmp.ne.s32.totalorder %s69, %s72
      %p78 = scmp.eq.s32.totalorder %s17, 0
      %p79 = por %p77, %p78
      %p80 = scmp.ne.s32.totalorder %s69, %s72
      %p81 = scmp.eq.s32.totalorder %s22, 3
      %p82 = por %p80, %p81
      %p83 = scmp.ne.s32.totalorder %s72, %s73
      %p84 = scmp.eq.s32.totalorder %s22, 0
      %p85 = por %p83, %p84
      %p86 = scmp.ne.s32.totalorder %s72, %s73
      %p87 = scmp.eq.s32.totalorder %s23, 3
      %p88 = por %p86, %p87
      %p90 = scmp.ne.s32.totalorder %s73, %s89
      %p91 = scmp.eq.s32.totalorder %s23, 0
      %p92 = por %p90, %p91
      %s94 = sadd.s32 %s93, 1
      %p97 = scmp.eq.s32.totalorder %s17, 3
      %p98 = scmp.ne.s32.totalorder %s93, %s95
      %p99 = scmp.eq.s32.totalorder %s17, 0
      %p100 = por %p98, %p99
      %p101 = scmp.ne.s32.totalorder %s93, %s95
      %p102 = scmp.eq.s32.totalorder %s22, 3
      %p103 = por %p101, %p102
      %p104 = scmp.ne.s32.totalorder %s95, %s96
      %p105 = scmp.eq.s32.totalorder %s22, 0
      %p106 = por %p104, %p105
      %p107 = scmp.ne.s32.totalorder %s95, %s96
      %p108 = scmp.eq.s32.totalorder %s23, 3
      %p109 = por %p107, %p108
      %p111 = scmp.ne.s32.totalorder %s96, %s110
      %p112 = scmp.eq.s32.totalorder %s23, 0
      %p113 = por %p111, %p112
      %s114 = ssub.s32 %s24, %s36
      %p115 = scmp.eq.s32.totalorder %s114, 0
      %s117 = sadd.s32 %s116, 1
      %s118 = scalar_select %p115, %s116, %s117
      %p121 = pneg %p115
      %p122 = scmp.eq.s32.totalorder %s17, 3
      %p123 = por %p121, %p122
      %p124 = scmp.ne.s32.totalorder %s116, %s119
      %p125 = scmp.eq.s32.totalorder %s17, 0
      %p126 = por %p124, %p125
      %p127 = scmp.ne.s32.totalorder %s116, %s119
      %p128 = scmp.eq.s32.totalorder %s22, 3
      %p129 = por %p127, %p128
      %p130 = scmp.ne.s32.totalorder %s119, %s120
      %p131 = scmp.eq.s32.totalorder %s22, 0
      %p132 = por %p130, %p131
      %p133 = scmp.ne.s32.totalorder %s119, %s120
      %p134 = scmp.eq.s32.totalorder %s23, 3
      %p135 = por %p133, %p134
      %p137 = scmp.ne.s32.totalorder %s120, %s136
      %p138 = scmp.eq.s32.totalorder %s23, 0
      %p139 = por %p137, %p138
      %s140 = ssub.s32 %s24, %s36
      %p141 = scmp.eq.s32.totalorder %s140, 0
      %s143 = sadd.s32 %s142, 1
      %s144 = scalar_select %p141, %s142, %s143
      %p147 = pneg %p141
      %p148 = scmp.eq.s32.totalorder %s17, 3
      %p149 = por %p147, %p148
      %p150 = scmp.ne.s32.totalorder %s142, %s145
      %p151 = scmp.eq.s32.totalorder %s17, 0
      %p152 = por %p150, %p151
      %p153 = scmp.ne.s32.totalorder %s142, %s145
      %p154 = scmp.eq.s32.totalorder %s22, 3
      %p155 = por %p153, %p154
      %p156 = scmp.ne.s32.totalorder %s145, %s146
      %p157 = scmp.eq.s32.totalorder %s22, 0
      %p158 = por %p156, %p157
      %p159 = scmp.ne.s32.totalorder %s145, %s146
      %p160 = scmp.eq.s32.totalorder %s23, 3
      %p161 = por %p159, %p160
      %p163 = scmp.ne.s32.totalorder %s146, %s162
      %p164 = scmp.eq.s32.totalorder %s23, 0
      %p165 = por %p163, %p164
      %p166 = scmp.le.s32.totalorder 1, %s17
      %p167 = scmp.lt.s32.totalorder %s17, 5
      %p168 = pnand %p166, %p167
      %p169 = pneg %p168
      // Predicated region
      $region9: #{tpu_custom_call.1} parent=5 // pred_check
        _
      $region10: #{tpu_custom_call.1} parent=5 // pred_check_branch
        %171 = sbr.rel (%p168) target = $region12
      $region11: #{tpu_custom_call.1} parent=5 // pred_region
        %s172 = ssub.s32 %s17, 1
        // Predicated region
        $region13: #{tpu_custom_call.1} parent=11 // pred_check
          %p173 = pneg %p106
        $region14: #{tpu_custom_call.1} parent=11 // pred_check_branch
          %175 = sbr.rel (%p173) target = $region16
        $region15: #{tpu_custom_call.1} parent=11 // pred_region
          _
        $region16: #{tpu_custom_call.1} parent=11 // pred_fallthru
          _
      $region12: #{tpu_custom_call.1} parent=5 // pred_fallthru
        _
      %p176 = scmp.lt.s32.totalorder %s17, 4
      // Predicated region
      $region17: #{tpu_custom_call.1} parent=5 // pred_check
        %p177 = pneg %p176
      $region18: #{tpu_custom_call.1} parent=5 // pred_check_branch
        %179 = sbr.rel (%p177) target = $region20
      $region19: #{tpu_custom_call.1} parent=5 // pred_region
        // Predicated region
        $region21: #{tpu_custom_call.1} parent=19 // pred_check
          %p180 = pneg %p51
        $region22: #{tpu_custom_call.1} parent=19 // pred_check_branch
          %182 = sbr.rel (%p180) target = $region24
        $region23: #{tpu_custom_call.1} parent=19 // pred_region
          %s183 = smul.u32 4, %s25
          %p184 = scmp.lt.s32.totalorder %s24, 1
          %s185 = scalar_select %p184, %s24, 1
          %p186 = scmp.lt.s32.totalorder %s183, 7
          %s187 = scalar_select %p186, %s183, 7
          %s188 = smul.addr %s185, 8
          %s189 = sadd.s32 %s187, %s188
          %s190 = smul.addr %s189, 8
          %s191 = scalar_lea.vmem %s0, %s190
          %s192 = smul.u32 4, %s25
        $region24: #{tpu_custom_call.1} parent=19 // pred_fallthru
          _
        // Predicated region
        $region25: #{tpu_custom_call.1} parent=19 // pred_check
          %p193 = pneg %p79
        $region26: #{tpu_custom_call.1} parent=19 // pred_check_branch
          %195 = sbr.rel (%p193) target = $region28
        $region27: #{tpu_custom_call.1} parent=19 // pred_region
          %p196 = scmp.lt.s32.totalorder %s24, 1
          %s197 = scalar_select %p196, %s24, 1
          %p198 = scmp.lt.s32.totalorder %s25, 1
          %s199 = scalar_select %p198, %s25, 1
          %s200 = smul.addr %s197, 2
          %s201 = sadd.s32 %s199, %s200
          %s202 = smul.addr %s201, 8
          %s203 = scalar_lea.vmem %s1, %s202
        $region28: #{tpu_custom_call.1} parent=19 // pred_fallthru
          _
      $region20: #{tpu_custom_call.1} parent=5 // pred_fallthru
        _
      %p204 = scmp.le.s32.totalorder 1, %s17
      %p205 = scmp.lt.s32.totalorder %s17, 5
      %p206 = pnand %p204, %p205
      %p207 = pneg %p206
      // Predicated region
      $region29: #{tpu_custom_call.1} parent=5 // pred_check
        _
      $region30: #{tpu_custom_call.1} parent=5 // pred_check_branch
        %209 = sbr.rel (%p206) target = $region32
      $region31: #{tpu_custom_call.1} parent=5 // pred_region
        %s210 = ssub.s32 %s17, 1
        %s211 = smul.u32 4, %s27
        %p212 = scmp.lt.s32.totalorder %s26, 1
        %s213 = scalar_select %p212, %s26, 1
        %p214 = scmp.lt.s32.totalorder %s211, 7
        %s215 = scalar_select %p214, %s211, 7
        %s216 = smul.addr %s213, 8
        %s217 = sadd.s32 %s215, %s216
        %s218 = smul.addr %s217, 8
        %s219 = scalar_lea.vmem %s0, %s218
        %p220 = pneg %p57
        %p221 = pneg %p54
        %p222 = scmp.lt.s32.totalorder %s26, 1
        %s223 = scalar_select %p222, %s26, 1
        %p224 = scmp.lt.s32.totalorder %s27, 1
        %s225 = scalar_select %p224, %s27, 1
        %s226 = smul.addr %s223, 2
        %s227 = sadd.s32 %s225, %s226
        %s228 = smul.addr %s227, 8
        %s229 = scalar_lea.vmem %s1, %s228
        %p230 = pneg %p85
        %p231 = pneg %p82
        %p232 = pneg %p106
        %p233 = pneg %p103
        %p234 = pneg %p132
        %p235 = pneg %p129
        %s236 = sand.u32 %s119, 1
        %s237 = scalar_lea.sflag [#allocation4], %s236
        %s238 = sand.u32 %s119, 1
        %s239 = smul.addr %s238, 4
        %s240 = scalar_lea.vmem [#allocation3], %s239
        %p241 = pneg %p158
        %p242 = pneg %p155
        %s243 = sand.u32 %s145, 1
        %s244 = scalar_lea.sflag [#allocation6], %s243
        %s245 = sand.u32 %s145, 1
        %s246 = scalar_lea.vmem [#allocation5], %s245
        %s247 = smul.u32 4, %s27
        %p248 = scmp.lt.s32.totalorder %s26, 1
        %s249 = scalar_select %p248, %s26, 1
        %p250 = scmp.lt.s32.totalorder %s247, 7
        %s251 = scalar_select %p250, %s247, 7
        %s252 = smul.addr %s249, 8
        %s253 = sadd.s32 %s251, %s252
        %s254 = smul.addr %s253, 8
        %s255 = scalar_lea.vmem %s0, %s254
        %s256 = smul.u32 4, %s27
        %p257 = scmp.lt.s32.totalorder %s26, 1
        %s258 = scalar_select %p257, %s26, 1
        %p259 = scmp.lt.s32.totalorder %s27, 1
        %s260 = scalar_select %p259, %s27, 1
        %s261 = smul.addr %s258, 2
        %s262 = sadd.s32 %s260, %s261
        %s263 = smul.addr %s262, 8
        %s264 = scalar_lea.vmem %s1, %s263
        %p265 = scmp.eq.s32.totalorder %s27, 0
        // Predicated region
        $region33: #{tpu_custom_call.1} parent=31 // pred_check
          %p266 = pneg %p265
        $region34: #{tpu_custom_call.1} parent=31 // pred_check_branch
          %268 = sbr.rel (%p266) target = $region36
        $region35: #{tpu_custom_call.1} parent=31 // pred_region
          %269 = vst [vmem:[#allocation2] sm:$0x1f] 0.0
        $region36: #{tpu_custom_call.1} parent=31 // pred_fallthru
          _
        %v270 = vld [vmem:[%s264] sm:$0xff]
        %v271 = vlaneseq
        %v272 = vshrl.u32 %v271, 7
        %v273 = vadd.s32 %v272, 8
        %v274 = vadd.s32 %v272, 16
        %v275 = vadd.s32 %v272, 24
        %v276 = vadd.s32 %v272, 32
        %v277 = vadd.s32 %v272, 40
        %v278 = vadd.s32 %v272, 48
        %v279 = vadd.s32 %v272, 56
        %v280 = vadd.s32 %v272, 64
        %v281 = vadd.s32 %v272, 72
        %v282 = vadd.s32 %v272, 80
        %v283 = vadd.s32 %v272, 88
        %v284 = vadd.s32 %v272, 96
        %v285 = vadd.s32 %v272, 104
        %v286 = vadd.s32 %v272, 112
        %v287 = vadd.s32 %v272, 120
        %v288 = vcombine.high %v270, %v270
        %v290 = vunpack.c.l.s4 1966171168
        %v291 = vunpack.c.0.s8 %v290
        %v292 = vlaneseq
        %v293 = vshrl.u32 %v292, 7
        %v294 = vsub.s32 %v291, %v293
        %v295 = vrot.slane %v270, %v294
        %v297 = vunpack.c.l.s4 1966171168
        %v298 = vunpack.c.0.s8 %v297
        %v299 = vlaneseq
        %v300 = vshrl.u32 %v299, 7
        %v301 = vsub.s32 %v298, %v300
        %v302 = vrot.slane %v288, %v301
        %v303 = vcombine.high %v295, %v295
        %v304 = vcombine.high %v302, %v302
        %v306 = vunpack.c.l.s4 1966171168
        %v307 = vunpack.c.0.s8 %v306
        %v308 = vlaneseq
        %v309 = vshrl.u32 %v308, 7
        %v310 = vsub.s32 %v307, %v309
        %v311 = vrot.slane %v295, %v310
        %v313 = vunpack.c.l.s4 1966171168
        %v314 = vunpack.c.0.s8 %v313
        %v315 = vlaneseq
        %v316 = vshrl.u32 %v315, 7
        %v317 = vsub.s32 %v314, %v316
        %v318 = vrot.slane %v302, %v317
        %v320 = vunpack.c.l.s4 1966171168
        %v321 = vunpack.c.0.s8 %v320
        %v322 = vlaneseq
        %v323 = vshrl.u32 %v322, 7
        %v324 = vsub.s32 %v321, %v323
        %v325 = vrot.slane %v303, %v324
        %v327 = vunpack.c.l.s4 1966171168
        %v328 = vunpack.c.0.s8 %v327
        %v329 = vlaneseq
        %v330 = vshrl.u32 %v329, 7
        %v331 = vsub.s32 %v328, %v330
        %v332 = vrot.slane %v304, %v331
        %v333 = vcombine.high %v311, %v311
        %v334 = vcombine.high %v318, %v318
        %v335 = vcombine.high %v325, %v325
        %v336 = vcombine.high %v332, %v332
        %v337 = vlaneseq
        %v338 = vshrl.u32 %v337, 7
        %v339 = vsub.s32 0, %v338
        %v340 = vrot.slane %v311, %v339
        %v341 = vlaneseq
        %v342 = vshrl.u32 %v341, 7
        %v343 = vsub.s32 0, %v342
        %v344 = vrot.slane %v325, %v343
        %v345 = vlaneseq
        %v346 = vshrl.u32 %v345, 7
        %v347 = vsub.s32 0, %v346
        %v348 = vrot.slane %v333, %v347
        %v349 = vlaneseq
        %v350 = vshrl.u32 %v349, 7
        %v351 = vsub.s32 0, %v350
        %v352 = vrot.slane %v335, %v351
        %v353 = vlaneseq
        %v354 = vshrl.u32 %v353, 7
        %v355 = vsub.s32 0, %v354
        %v356 = vrot.slane %v318, %v355
        %v357 = vlaneseq
        %v358 = vshrl.u32 %v357, 7
        %v359 = vsub.s32 0, %v358
        %v360 = vrot.slane %v332, %v359
        %v361 = vlaneseq
        %v362 = vshrl.u32 %v361, 7
        %v363 = vsub.s32 0, %v362
        %v364 = vrot.slane %v334, %v363
        %v365 = vlaneseq
        %v366 = vshrl.u32 %v365, 7
        %v367 = vsub.s32 0, %v366
        %v368 = vrot.slane %v336, %v367
        %vm369 = vcmp.eq.s32.totalorder %v340, %v272
        %vm370 = vcmp.eq.s32.totalorder %v340, %v273
        %vm371 = vcmp.eq.s32.totalorder %v340, %v274
        %vm372 = vcmp.eq.s32.totalorder %v340, %v275
        %vm373 = vcmp.eq.s32.totalorder %v340, %v276
        %vm374 = vcmp.eq.s32.totalorder %v340, %v277
        %vm375 = vcmp.eq.s32.totalorder %v340, %v278
        %vm376 = vcmp.eq.s32.totalorder %v340, %v279
        %vm377 = vcmp.eq.s32.totalorder %v340, %v280
        %vm378 = vcmp.eq.s32.totalorder %v340, %v281
        %vm379 = vcmp.eq.s32.totalorder %v340, %v282
        %vm380 = vcmp.eq.s32.totalorder %v340, %v283
        %vm381 = vcmp.eq.s32.totalorder %v340, %v284
        %vm382 = vcmp.eq.s32.totalorder %v340, %v285
        %vm383 = vcmp.eq.s32.totalorder %v340, %v286
        %vm384 = vcmp.eq.s32.totalorder %v340, %v287
        %vm385 = vcmp.eq.s32.totalorder %v344, %v272
        %vm386 = vcmp.eq.s32.totalorder %v344, %v273
        %vm387 = vcmp.eq.s32.totalorder %v344, %v274
        %vm388 = vcmp.eq.s32.totalorder %v344, %v275
        %vm389 = vcmp.eq.s32.totalorder %v344, %v276
        %vm390 = vcmp.eq.s32.totalorder %v344, %v277
        %vm391 = vcmp.eq.s32.totalorder %v344, %v278
        %vm392 = vcmp.eq.s32.totalorder %v344, %v279
        %vm393 = vcmp.eq.s32.totalorder %v344, %v280
        %vm394 = vcmp.eq.s32.totalorder %v344, %v281
        %vm395 = vcmp.eq.s32.totalorder %v344, %v282
        %vm396 = vcmp.eq.s32.totalorder %v344, %v283
        %vm397 = vcmp.eq.s32.totalorder %v344, %v284
        %vm398 = vcmp.eq.s32.totalorder %v344, %v285
        %vm399 = vcmp.eq.s32.totalorder %v344, %v286
        %vm400 = vcmp.eq.s32.totalorder %v344, %v287
        %vm401 = vcmp.eq.s32.totalorder %v348, %v272
        %vm402 = vcmp.eq.s32.totalorder %v348, %v273
        %vm403 = vcmp.eq.s32.totalorder %v348, %v274
        %vm404 = vcmp.eq.s32.totalorder %v348, %v275
        %vm405 = vcmp.eq.s32.totalorder %v348, %v276
        %vm406 = vcmp.eq.s32.totalorder %v348, %v277
        %vm407 = vcmp.eq.s32.totalorder %v348, %v278
        %vm408 = vcmp.eq.s32.totalorder %v348, %v279
        %vm409 = vcmp.eq.s32.totalorder %v348, %v280
        %vm410 = vcmp.eq.s32.totalorder %v348, %v281
        %vm411 = vcmp.eq.s32.totalorder %v348, %v282
        %vm412 = vcmp.eq.s32.totalorder %v348, %v283
        %vm413 = vcmp.eq.s32.totalorder %v348, %v284
        %vm414 = vcmp.eq.s32.totalorder %v348, %v285
        %vm415 = vcmp.eq.s32.totalorder %v348, %v286
        %vm416 = vcmp.eq.s32.totalorder %v348, %v287
        %vm417 = vcmp.eq.s32.totalorder %v352, %v272
        %vm418 = vcmp.eq.s32.totalorder %v352, %v273
        %vm419 = vcmp.eq.s32.totalorder %v352, %v274
        %vm420 = vcmp.eq.s32.totalorder %v352, %v275
        %vm421 = vcmp.eq.s32.totalorder %v352, %v276
        %vm422 = vcmp.eq.s32.totalorder %v352, %v277
        %vm423 = vcmp.eq.s32.totalorder %v352, %v278
        %vm424 = vcmp.eq.s32.totalorder %v352, %v279
        %vm425 = vcmp.eq.s32.totalorder %v352, %v280
        %vm426 = vcmp.eq.s32.totalorder %v352, %v281
        %vm427 = vcmp.eq.s32.totalorder %v352, %v282
        %vm428 = vcmp.eq.s32.totalorder %v352, %v283
        %vm429 = vcmp.eq.s32.totalorder %v352, %v284
        %vm430 = vcmp.eq.s32.totalorder %v352, %v285
        %vm431 = vcmp.eq.s32.totalorder %v352, %v286
        %vm432 = vcmp.eq.s32.totalorder %v352, %v287
        %vm433 = vcmp.eq.s32.totalorder %v356, %v272
        %vm434 = vcmp.eq.s32.totalorder %v356, %v273
        %vm435 = vcmp.eq.s32.totalorder %v356, %v274
        %vm436 = vcmp.eq.s32.totalorder %v356, %v275
        %vm437 = vcmp.eq.s32.totalorder %v356, %v276
        %vm438 = vcmp.eq.s32.totalorder %v356, %v277
        %vm439 = vcmp.eq.s32.totalorder %v356, %v278
        %vm440 = vcmp.eq.s32.totalorder %v356, %v279
        %vm441 = vcmp.eq.s32.totalorder %v356, %v280
        %vm442 = vcmp.eq.s32.totalorder %v356, %v281
        %vm443 = vcmp.eq.s32.totalorder %v356, %v282
        %vm444 = vcmp.eq.s32.totalorder %v356, %v283
        %vm445 = vcmp.eq.s32.totalorder %v356, %v284
        %vm446 = vcmp.eq.s32.totalorder %v356, %v285
        %vm447 = vcmp.eq.s32.totalorder %v356, %v286
        %vm448 = vcmp.eq.s32.totalorder %v356, %v287
        %vm449 = vcmp.eq.s32.totalorder %v360, %v272
        %vm450 = vcmp.eq.s32.totalorder %v360, %v273
        %vm451 = vcmp.eq.s32.totalorder %v360, %v274
        %vm452 = vcmp.eq.s32.totalorder %v360, %v275
        %vm453 = vcmp.eq.s32.totalorder %v360, %v276
        %vm454 = vcmp.eq.s32.totalorder %v360, %v277
        %vm455 = vcmp.eq.s32.totalorder %v360, %v278
        %vm456 = vcmp.eq.s32.totalorder %v360, %v279
        %vm457 = vcmp.eq.s32.totalorder %v360, %v280
        %vm458 = vcmp.eq.s32.totalorder %v360, %v281
        %vm459 = vcmp.eq.s32.totalorder %v360, %v282
        %vm460 = vcmp.eq.s32.totalorder %v360, %v283
        %vm461 = vcmp.eq.s32.totalorder %v360, %v284
        %vm462 = vcmp.eq.s32.totalorder %v360, %v285
        %vm463 = vcmp.eq.s32.totalorder %v360, %v286
        %vm464 = vcmp.eq.s32.totalorder %v360, %v287
        %vm465 = vcmp.eq.s32.totalorder %v364, %v272
        %vm466 = vcmp.eq.s32.totalorder %v364, %v273
        %vm467 = vcmp.eq.s32.totalorder %v364, %v274
        %vm468 = vcmp.eq.s32.totalorder %v364, %v275
        %vm469 = vcmp.eq.s32.totalorder %v364, %v276
        %vm470 = vcmp.eq.s32.totalorder %v364, %v277
        %vm471 = vcmp.eq.s32.totalorder %v364, %v278
        %vm472 = vcmp.eq.s32.totalorder %v364, %v279
        %vm473 = vcmp.eq.s32.totalorder %v364, %v280
        %vm474 = vcmp.eq.s32.totalorder %v364, %v281
        %vm475 = vcmp.eq.s32.totalorder %v364, %v282
        %vm476 = vcmp.eq.s32.totalorder %v364, %v283
        %vm477 = vcmp.eq.s32.totalorder %v364, %v284
        %vm478 = vcmp.eq.s32.totalorder %v364, %v285
        %vm479 = vcmp.eq.s32.totalorder %v364, %v286
        %vm480 = vcmp.eq.s32.totalorder %v364, %v287
        %vm481 = vcmp.eq.s32.totalorder %v368, %v272
        %vm482 = vcmp.eq.s32.totalorder %v368, %v273
        %vm483 = vcmp.eq.s32.totalorder %v368, %v274
        %vm484 = vcmp.eq.s32.totalorder %v368, %v275
        %vm485 = vcmp.eq.s32.totalorder %v368, %v276
        %vm486 = vcmp.eq.s32.totalorder %v368, %v277
        %vm487 = vcmp.eq.s32.totalorder %v368, %v278
        %vm488 = vcmp.eq.s32.totalorder %v368, %v279
        %vm489 = vcmp.eq.s32.totalorder %v368, %v280
        %vm490 = vcmp.eq.s32.totalorder %v368, %v281
        %vm491 = vcmp.eq.s32.totalorder %v368, %v282
        %vm492 = vcmp.eq.s32.totalorder %v368, %v283
        %vm493 = vcmp.eq.s32.totalorder %v368, %v284
        %vm494 = vcmp.eq.s32.totalorder %v368, %v285
        %vm495 = vcmp.eq.s32.totalorder %v368, %v286
        %vm496 = vcmp.eq.s32.totalorder %v368, %v287
        %v497 = vsel %vm369, 1, 0
        %v498 = vsel %vm370, 1, 0
        %v499 = vsel %vm371, 1, 0
        %v500 = vsel %vm372, 1, 0
        %v501 = vsel %vm373, 1, 0
        %v502 = vsel %vm374, 1, 0
        %v503 = vsel %vm375, 1, 0
        %v504 = vsel %vm376, 1, 0
        %v505 = vsel %vm377, 1, 0
        %v506 = vsel %vm378, 1, 0
        %v507 = vsel %vm379, 1, 0
        %v508 = vsel %vm380, 1, 0
        %v509 = vsel %vm381, 1, 0
        %v510 = vsel %vm382, 1, 0
        %v511 = vsel %vm383, 1, 0
        %v512 = vsel %vm384, 1, 0
        %v513 = vsel %vm385, 1, 0
        %v514 = vsel %vm386, 1, 0
        %v515 = vsel %vm387, 1, 0
        %v516 = vsel %vm388, 1, 0
        %v517 = vsel %vm389, 1, 0
        %v518 = vsel %vm390, 1, 0
        %v519 = vsel %vm391, 1, 0
        %v520 = vsel %vm392, 1, 0
        %v521 = vsel %vm393, 1, 0
        %v522 = vsel %vm394, 1, 0
        %v523 = vsel %vm395, 1, 0
        %v524 = vsel %vm396, 1, 0
        %v525 = vsel %vm397, 1, 0
        %v526 = vsel %vm398, 1, 0
        %v527 = vsel %vm399, 1, 0
        %v528 = vsel %vm400, 1, 0
        %v529 = vsel %vm401, 1, 0
        %v530 = vsel %vm402, 1, 0
        %v531 = vsel %vm403, 1, 0
        %v532 = vsel %vm404, 1, 0
        %v533 = vsel %vm405, 1, 0
        %v534 = vsel %vm406, 1, 0
        %v535 = vsel %vm407, 1, 0
        %v536 = vsel %vm408, 1, 0
        %v537 = vsel %vm409, 1, 0
        %v538 = vsel %vm410, 1, 0
        %v539 = vsel %vm411, 1, 0
        %v540 = vsel %vm412, 1, 0
        %v541 = vsel %vm413, 1, 0
        %v542 = vsel %vm414, 1, 0
        %v543 = vsel %vm415, 1, 0
        %v544 = vsel %vm416, 1, 0
        %v545 = vsel %vm417, 1, 0
        %v546 = vsel %vm418, 1, 0
        %v547 = vsel %vm419, 1, 0
        %v548 = vsel %vm420, 1, 0
        %v549 = vsel %vm421, 1, 0
        %v550 = vsel %vm422, 1, 0
        %v551 = vsel %vm423, 1, 0
        %v552 = vsel %vm424, 1, 0
        %v553 = vsel %vm425, 1, 0
        %v554 = vsel %vm426, 1, 0
        %v555 = vsel %vm427, 1, 0
        %v556 = vsel %vm428, 1, 0
        %v557 = vsel %vm429, 1, 0
        %v558 = vsel %vm430, 1, 0
        %v559 = vsel %vm431, 1, 0
        %v560 = vsel %vm432, 1, 0
        %v561 = vsel %vm433, 1, 0
        %v562 = vsel %vm434, 1, 0
        %v563 = vsel %vm435, 1, 0
        %v564 = vsel %vm436, 1, 0
        %v565 = vsel %vm437, 1, 0
        %v566 = vsel %vm438, 1, 0
        %v567 = vsel %vm439, 1, 0
        %v568 = vsel %vm440, 1, 0
        %v569 = vsel %vm441, 1, 0
        %v570 = vsel %vm442, 1, 0
        %v571 = vsel %vm443, 1, 0
        %v572 = vsel %vm444, 1, 0
        %v573 = vsel %vm445, 1, 0
        %v574 = vsel %vm446, 1, 0
        %v575 = vsel %vm447, 1, 0
        %v576 = vsel %vm448, 1, 0
        %v577 = vsel %vm449, 1, 0
        %v578 = vsel %vm450, 1, 0
        %v579 = vsel %vm451, 1, 0
        %v580 = vsel %vm452, 1, 0
        %v581 = vsel %vm453, 1, 0
        %v582 = vsel %vm454, 1, 0
        %v583 = vsel %vm455, 1, 0
        %v584 = vsel %vm456, 1, 0
        %v585 = vsel %vm457, 1, 0
        %v586 = vsel %vm458, 1, 0
        %v587 = vsel %vm459, 1, 0
        %v588 = vsel %vm460, 1, 0
        %v589 = vsel %vm461, 1, 0
        %v590 = vsel %vm462, 1, 0
        %v591 = vsel %vm463, 1, 0
        %v592 = vsel %vm464, 1, 0
        %v593 = vsel %vm465, 1, 0
        %v594 = vsel %vm466, 1, 0
        %v595 = vsel %vm467, 1, 0
        %v596 = vsel %vm468, 1, 0
        %v597 = vsel %vm469, 1, 0
        %v598 = vsel %vm470, 1, 0
        %v599 = vsel %vm471, 1, 0
        %v600 = vsel %vm472, 1, 0
        %v601 = vsel %vm473, 1, 0
        %v602 = vsel %vm474, 1, 0
        %v603 = vsel %vm475, 1, 0
        %v604 = vsel %vm476, 1, 0
        %v605 = vsel %vm477, 1, 0
        %v606 = vsel %vm478, 1, 0
        %v607 = vsel %vm479, 1, 0
        %v608 = vsel %vm480, 1, 0
        %v609 = vsel %vm481, 1, 0
        %v610 = vsel %vm482, 1, 0
        %v611 = vsel %vm483, 1, 0
        %v612 = vsel %vm484, 1, 0
        %v613 = vsel %vm485, 1, 0
        %v614 = vsel %vm486, 1, 0
        %v615 = vsel %vm487, 1, 0
        %v616 = vsel %vm488, 1, 0
        %v617 = vsel %vm489, 1, 0
        %v618 = vsel %vm490, 1, 0
        %v619 = vsel %vm491, 1, 0
        %v620 = vsel %vm492, 1, 0
        %v621 = vsel %vm493, 1, 0
        %v622 = vsel %vm494, 1, 0
        %v623 = vsel %vm495, 1, 0
        %v624 = vsel %vm496, 1, 0
        %v625 = vcvt.s32.f32 %v497
        %v626 = vcvt.s32.f32 %v498
        %v627 = vcvt.s32.f32 %v499
        %v628 = vcvt.s32.f32 %v500
        %v629 = vcvt.s32.f32 %v501
        %v630 = vcvt.s32.f32 %v502
        %v631 = vcvt.s32.f32 %v503
        %v632 = vcvt.s32.f32 %v504
        %v633 = vcvt.s32.f32 %v505
        %v634 = vcvt.s32.f32 %v506
        %v635 = vcvt.s32.f32 %v507
        %v636 = vcvt.s32.f32 %v508
        %v637 = vcvt.s32.f32 %v509
        %v638 = vcvt.s32.f32 %v510
        %v639 = vcvt.s32.f32 %v511
        %v640 = vcvt.s32.f32 %v512
        %v641 = vcvt.s32.f32 %v513
        %v642 = vcvt.s32.f32 %v514
        %v643 = vcvt.s32.f32 %v515
        %v644 = vcvt.s32.f32 %v516
        %v645 = vcvt.s32.f32 %v517
        %v646 = vcvt.s32.f32 %v518
        %v647 = vcvt.s32.f32 %v519
        %v648 = vcvt.s32.f32 %v520
        %v649 = vcvt.s32.f32 %v521
        %v650 = vcvt.s32.f32 %v522
        %v651 = vcvt.s32.f32 %v523
        %v652 = vcvt.s32.f32 %v524
        %v653 = vcvt.s32.f32 %v525
        %v654 = vcvt.s32.f32 %v526
        %v655 = vcvt.s32.f32 %v527
        %v656 = vcvt.s32.f32 %v528
        %v657 = vcvt.s32.f32 %v529
        %v658 = vcvt.s32.f32 %v530
        %v659 = vcvt.s32.f32 %v531
        %v660 = vcvt.s32.f32 %v532
        %v661 = vcvt.s32.f32 %v533
        %v662 = vcvt.s32.f32 %v534
        %v663 = vcvt.s32.f32 %v535
        %v664 = vcvt.s32.f32 %v536
        %v665 = vcvt.s32.f32 %v537
        %v666 = vcvt.s32.f32 %v538
        %v667 = vcvt.s32.f32 %v539
        %v668 = vcvt.s32.f32 %v540
        %v669 = vcvt.s32.f32 %v541
        %v670 = vcvt.s32.f32 %v542
        %v671 = vcvt.s32.f32 %v543
        %v672 = vcvt.s32.f32 %v544
        %v673 = vcvt.s32.f32 %v545
        %v674 = vcvt.s32.f32 %v546
        %v675 = vcvt.s32.f32 %v547
        %v676 = vcvt.s32.f32 %v548
        %v677 = vcvt.s32.f32 %v549
        %v678 = vcvt.s32.f32 %v550
        %v679 = vcvt.s32.f32 %v551
        %v680 = vcvt.s32.f32 %v552
        %v681 = vcvt.s32.f32 %v553
        %v682 = vcvt.s32.f32 %v554
        %v683 = vcvt.s32.f32 %v555
        %v684 = vcvt.s32.f32 %v556
        %v685 = vcvt.s32.f32 %v557
        %v686 = vcvt.s32.f32 %v558
        %v687 = vcvt.s32.f32 %v559
        %v688 = vcvt.s32.f32 %v560
        %v689 = vcvt.s32.f32 %v561
        %v690 = vcvt.s32.f32 %v562
        %v691 = vcvt.s32.f32 %v563
        %v692 = vcvt.s32.f32 %v564
        %v693 = vcvt.s32.f32 %v565
        %v694 = vcvt.s32.f32 %v566
        %v695 = vcvt.s32.f32 %v567
        %v696 = vcvt.s32.f32 %v568
        %v697 = vcvt.s32.f32 %v569
        %v698 = vcvt.s32.f32 %v570
        %v699 = vcvt.s32.f32 %v571
        %v700 = vcvt.s32.f32 %v572
        %v701 = vcvt.s32.f32 %v573
        %v702 = vcvt.s32.f32 %v574
        %v703 = vcvt.s32.f32 %v575
        %v704 = vcvt.s32.f32 %v576
        %v705 = vcvt.s32.f32 %v577
        %v706 = vcvt.s32.f32 %v578
        %v707 = vcvt.s32.f32 %v579
        %v708 = vcvt.s32.f32 %v580
        %v709 = vcvt.s32.f32 %v581
        %v710 = vcvt.s32.f32 %v582
        %v711 = vcvt.s32.f32 %v583
        %v712 = vcvt.s32.f32 %v584
        %v713 = vcvt.s32.f32 %v585
        %v714 = vcvt.s32.f32 %v586
        %v715 = vcvt.s32.f32 %v587
        %v716 = vcvt.s32.f32 %v588
        %v717 = vcvt.s32.f32 %v589
        %v718 = vcvt.s32.f32 %v590
        %v719 = vcvt.s32.f32 %v591
        %v720 = vcvt.s32.f32 %v592
        %v721 = vcvt.s32.f32 %v593
        %v722 = vcvt.s32.f32 %v594
        %v723 = vcvt.s32.f32 %v595
        %v724 = vcvt.s32.f32 %v596
        %v725 = vcvt.s32.f32 %v597
        %v726 = vcvt.s32.f32 %v598
        %v727 = vcvt.s32.f32 %v599
        %v728 = vcvt.s32.f32 %v600
        %v729 = vcvt.s32.f32 %v601
        %v730 = vcvt.s32.f32 %v602
        %v731 = vcvt.s32.f32 %v603
        %v732 = vcvt.s32.f32 %v604
        %v733 = vcvt.s32.f32 %v605
        %v734 = vcvt.s32.f32 %v606
        %v735 = vcvt.s32.f32 %v607
        %v736 = vcvt.s32.f32 %v608
        %v737 = vcvt.s32.f32 %v609
        %v738 = vcvt.s32.f32 %v610
        %v739 = vcvt.s32.f32 %v611
        %v740 = vcvt.s32.f32 %v612
        %v741 = vcvt.s32.f32 %v613
        %v742 = vcvt.s32.f32 %v614
        %v743 = vcvt.s32.f32 %v615
        %v744 = vcvt.s32.f32 %v616
        %v745 = vcvt.s32.f32 %v617
        %v746 = vcvt.s32.f32 %v618
        %v747 = vcvt.s32.f32 %v619
        %v748 = vcvt.s32.f32 %v620
        %v749 = vcvt.s32.f32 %v621
        %v750 = vcvt.s32.f32 %v622
        %v751 = vcvt.s32.f32 %v623
        %v752 = vcvt.s32.f32 %v624
        %v753 = vld [vmem:[%s2] sm:$0xff]
        %v754 = vld [vmem:[%s2 + $0x8] sm:$0xff]
        %vm755 = vcmask 130048
        %v757 = vsel %vm755, %v625, 0
        %v760 = vsel %vm755, %v626, 0
        %v763 = vsel %vm755, %v627, 0
        %v766 = vsel %vm755, %v628, 0
        %v769 = vsel %vm755, %v629, 0
        %v772 = vsel %vm755, %v630, 0
        %v775 = vsel %vm755, %v631, 0
        %v778 = vsel %vm755, %v632, 0
        %v781 = vsel %vm755, %v633, 0
        %v784 = vsel %vm755, %v634, 0
        %v787 = vsel %vm755, %v635, 0
        %v790 = vsel %vm755, %v636, 0
        %v793 = vsel %vm755, %v637, 0
        %v796 = vsel %vm755, %v638, 0
        %v799 = vsel %vm755, %v639, 0
        %v802 = vsel %vm755, %v640, 0
        %v805 = vsel %vm755, %v641, 0
        %v808 = vsel %vm755, %v642, 0
        %v811 = vsel %vm755, %v643, 0
        %v814 = vsel %vm755, %v644, 0
        %v817 = vsel %vm755, %v645, 0
        %v820 = vsel %vm755, %v646, 0
        %v823 = vsel %vm755, %v647, 0
        %v826 = vsel %vm755, %v648, 0
        %v829 = vsel %vm755, %v649, 0
        %v832 = vsel %vm755, %v650, 0
        %v835 = vsel %vm755, %v651, 0
        %v838 = vsel %vm755, %v652, 0
        %v841 = vsel %vm755, %v653, 0
        %v844 = vsel %vm755, %v654, 0
        %v847 = vsel %vm755, %v655, 0
        %v850 = vsel %vm755, %v656, 0
        %v853 = vsel %vm755, %v657, 0
        %v856 = vsel %vm755, %v658, 0
        %v859 = vsel %vm755, %v659, 0
        %v862 = vsel %vm755, %v660, 0
        %v865 = vsel %vm755, %v661, 0
        %v868 = vsel %vm755, %v662, 0
        %v871 = vsel %vm755, %v663, 0
        %v874 = vsel %vm755, %v664, 0
        %v877 = vsel %vm755, %v665, 0
        %v880 = vsel %vm755, %v666, 0
        %v883 = vsel %vm755, %v667, 0
        %v886 = vsel %vm755, %v668, 0
        %v889 = vsel %vm755, %v669, 0
        %v892 = vsel %vm755, %v670, 0
        %v895 = vsel %vm755, %v671, 0
        %v898 = vsel %vm755, %v672, 0
        %v901 = vsel %vm755, %v673, 0
        %v904 = vsel %vm755, %v674, 0
        %v907 = vsel %vm755, %v675, 0
        %v910 = vsel %vm755, %v676, 0
        %v913 = vsel %vm755, %v677, 0
        %v916 = vsel %vm755, %v678, 0
        %v919 = vsel %vm755, %v679, 0
        %v922 = vsel %vm755, %v680, 0
        %v925 = vsel %vm755, %v681, 0
        %v928 = vsel %vm755, %v682, 0
        %v931 = vsel %vm755, %v683, 0
        %v934 = vsel %vm755, %v684, 0
        %v937 = vsel %vm755, %v685, 0
        %v940 = vsel %vm755, %v686, 0
        %v943 = vsel %vm755, %v687, 0
        %v946 = vsel %vm755, %v688, 0
        %v949 = vsel %vm755, %v689, 0
        %v952 = vsel %vm755, %v690, 0
        %v955 = vsel %vm755, %v691, 0
        %v958 = vsel %vm755, %v692, 0
        %v961 = vsel %vm755, %v693, 0
        %v964 = vsel %vm755, %v694, 0
        %v967 = vsel %vm755, %v695, 0
        %v970 = vsel %vm755, %v696, 0
        %v973 = vsel %vm755, %v697, 0
        %v976 = vsel %vm755, %v698, 0
        %v979 = vsel %vm755, %v699, 0
        %v982 = vsel %vm755, %v700, 0
        %v985 = vsel %vm755, %v701, 0
        %v988 = vsel %vm755, %v702, 0
        %v991 = vsel %vm755, %v703, 0
        %v994 = vsel %vm755, %v704, 0
        %v997 = vsel %vm755, %v705, 0
        %v1000 = vsel %vm755, %v706, 0
        %v1003 = vsel %vm755, %v707, 0
        %v1006 = vsel %vm755, %v708, 0
        %v1009 = vsel %vm755, %v709, 0
        %v1012 = vsel %vm755, %v710, 0
        %v1015 = vsel %vm755, %v711, 0
        %v1018 = vsel %vm755, %v712, 0
        %v1021 = vsel %vm755, %v713, 0
        %v1024 = vsel %vm755, %v714, 0
        %v1027 = vsel %vm755, %v715, 0
        %v1030 = vsel %vm755, %v716, 0
        %v1033 = vsel %vm755, %v717, 0
        %v1036 = vsel %vm755, %v718, 0
        %v1039 = vsel %vm755, %v719, 0
        %v1042 = vsel %vm755, %v720, 0
        %v1045 = vsel %vm755, %v721, 0
        %v1048 = vsel %vm755, %v722, 0
        %v1051 = vsel %vm755, %v723, 0
        %v1054 = vsel %vm755, %v724, 0
        %v1057 = vsel %vm755, %v725, 0
        %v1060 = vsel %vm755, %v726, 0
        %v1063 = vsel %vm755, %v727, 0
        %v1066 = vsel %vm755, %v728, 0
        %v1069 = vsel %vm755, %v729, 0
        %v1072 = vsel %vm755, %v730, 0
        %v1075 = vsel %vm755, %v731, 0
        %v1078 = vsel %vm755, %v732, 0
        %v1081 = vsel %vm755, %v733, 0
        %v1084 = vsel %vm755, %v734, 0
        %v1087 = vsel %vm755, %v735, 0
        %v1090 = vsel %vm755, %v736, 0
        %v1093 = vsel %vm755, %v737, 0
        %v1096 = vsel %vm755, %v738, 0
        %v1099 = vsel %vm755, %v739, 0
        %v1102 = vsel %vm755, %v740, 0
        %v1105 = vsel %vm755, %v741, 0
        %v1108 = vsel %vm755, %v742, 0
        %v1111 = vsel %vm755, %v743, 0
        %v1114 = vsel %vm755, %v744, 0
        %v1117 = vsel %vm755, %v745, 0
        %v1120 = vsel %vm755, %v746, 0
        %v1123 = vsel %vm755, %v747, 0
        %v1126 = vsel %vm755, %v748, 0
        %v1129 = vsel %vm755, %v749, 0
        %v1132 = vsel %vm755, %v750, 0
        %v1135 = vsel %vm755, %v751, 0
        %v1138 = vsel %vm755, %v752, 0
        %1140 = vmatprep.subr.mxu0 0.0
        %1141 = vmatpush1.msra.mxu0 %v753
        %1142 = vmatprep.subr.mxu0 0.0
        %1143 = vmatpush1.msra.mxu0 %v754
        %1144 = vmatprep.subr.mxu0 0.0
        %1145 = vmatpush1.msra.mxu0 0.0
        %1146 = vmatprep.subr.mxu0 0.0
        %1147 = vmatpush1.msra.mxu0 0.0
        %1148 = vmatprep.subr.mxu0 0.0
        %1149 = vmatpush1.msra.mxu0 0.0
        %1150 = vmatprep.subr.mxu0 0.0
        %1151 = vmatpush1.msra.mxu0 0.0
        %1152 = vmatprep.subr.mxu0 0.0
        %1153 = vmatpush1.msra.mxu0 0.0
        %1154 = vmatprep.subr.mxu0 0.0
        %1155 = vmatpush1.msra.mxu0 0.0
        %1156 = vmatprep.subr.mxu0 0.0
        %1157 = vmatpush1.msra.mxu0 0.0
        %1158 = vmatprep.subr.mxu0 0.0
        %1159 = vmatpush1.msra.mxu0 0.0
        %1160 = vmatprep.subr.mxu0 0.0
        %1161 = vmatpush1.msra.mxu0 0.0
        %1162 = vmatprep.subr.mxu0 0.0
        %1163 = vmatpush1.msra.mxu0 0.0
        %1164 = vmatprep.subr.mxu0 0.0
        %1165 = vmatpush1.msra.mxu0 0.0
        %1166 = vmatprep.subr.mxu0 0.0
        %1167 = vmatpush1.msra.mxu0 0.0
        %1168 = vmatprep.subr.mxu0 0.0
        %1169 = vmatpush1.msra.mxu0 0.0
        %1170 = vmatprep.subr.mxu0 0.0
        %1171 = vmatpush1.msra.mxu0 0.0
        %1172 = vmatprep.subr.mxu0 0.0
        %1173 = vmatpush1.msra.mxu0 0.0
        %1174 = vmatprep.subr.mxu0 0.0
        %1175 = vmatpush1.msra.mxu0 0.0
        %1176 = vmatprep.subr.mxu0 0.0
        %1177 = vmatpush1.msra.mxu0 0.0
        %1178 = vmatprep.subr.mxu0 0.0
        %1179 = vmatpush1.msra.mxu0 0.0
        %1180 = vmatprep.subr.mxu0 0.0
        %1181 = vmatpush1.msra.mxu0 0.0
        %1182 = vmatprep.subr.mxu0 0.0
        %1183 = vmatpush1.msra.mxu0 0.0
        %1184 = vmatprep.subr.mxu0 0.0
        %1185 = vmatpush1.msra.mxu0 0.0
        %1186 = vmatprep.subr.mxu0 0.0
        %1187 = vmatpush1.msra.mxu0 0.0
        %1188 = vmatprep.subr.mxu0 0.0
        %1189 = vmatpush1.msra.mxu0 0.0
        %1190 = vmatprep.subr.mxu0 0.0
        %1191 = vmatpush1.msra.mxu0 0.0
        %1192 = vmatprep.subr.mxu0 0.0
        %1193 = vmatpush1.msra.mxu0 0.0
        %1194 = vmatprep.subr.mxu0 0.0
        %1195 = vmatpush1.msra.mxu0 0.0
        %1196 = vmatprep.subr.mxu0 0.0
        %1197 = vmatpush1.msra.mxu0 0.0
        %1198 = vmatprep.subr.mxu0 0.0
        %1199 = vmatpush1.msra.mxu0 0.0
        %1200 = vmatprep.subr.mxu0 0.0
        %1201 = vmatpush1.msra.mxu0 0.0
        %1202 = vmatprep.subr.mxu0 0.0
        %1203 = vmatpush1.msra.mxu0 0.0
        %1204 = vmatprep.mubr.f32.mxu0 0.0
        %1205 = vmatmul.mubr.f32.gmra.mrb[0].mxu0 %v757
        %v1206 = vpop.f32.mrb[0].mxu0
        %v1207 = vadd.f32 0.0, %v1206
        %v1208 = vpop.f32.mrb[0].mxu0
        %1209 = vmatprep.mubr.f32.mxu0 0.0
        %1210 = vmatmul.mubr.f32.gmra.mrb[0].mxu0 %v760
        %v1211 = vpop.f32.mrb[0].mxu0
        %v1212 = vadd.f32 0.0, %v1211
        %v1213 = vpop.f32.mrb[0].mxu0
        %1214 = vmatprep.mubr.f32.mxu0 0.0
        %1215 = vmatmul.mubr.f32.gmra.mrb[0].mxu0 %v763
        %v1216 = vpop.f32.mrb[0].mxu0
        %v1217 = vadd.f32 0.0, %v1216
        %v1218 = vpop.f32.mrb[0].mxu0
        %1219 = vmatprep.mubr.f32.mxu0 0.0
        %1220 = vmatmul.mubr.f32.gmra.mrb[0].mxu0 %v766
        %v1221 = vpop.f32.mrb[0].mxu0
        %v1222 = vadd.f32 0.0, %v1221
        %v1223 = vpop.f32.mrb[0].mxu0
        %1224 = vmatprep.mubr.f32.mxu0 0.0
        %1225 = vmatmul.mubr.f32.gmra.mrb[0].mxu0 %v769
        %v1226 = vpop.f32.mrb[0].mxu0
        %v1227 = vadd.f32 0.0, %v1226
        %v1228 = vpop.f32.mrb[0].mxu0
        %1229 = vmatprep.mubr.f32.mxu0 0.0
        %1230 = vmatmul.mubr.f32.gmra.mrb[0].mxu0 %v772
        %v1231 = vpop.f32.mrb[0].mxu0
        %v1232 = vadd.f32 0.0, %v1231
        %v1233 = vpop.f32.mrb[0].mxu0
        %1234 = vmatprep.mubr.f32.mxu0 0.0
        %1235 = vmatmul.mubr.f32.gmra.mrb[0].mxu0 %v775
        %v1236 = vpop.f32.mrb[0].mxu0
        %v1237 = vadd.f32 0.0, %v1236
        %v1238 = vpop.f32.mrb[0].mxu0
        %1239 = vmatprep.mubr.f32.mxu0 0.0
        %1240 = vmatmul.mubr.f32.gmra.mrb[0].mxu0 %v778
        %v1241 = vpop.f32.mrb[0].mxu0
        %v1242 = vadd.f32 0.0, %v1241
        %v1243 = vpop.f32.mrb[0].mxu0
        %1244 = vmatprep.mubr.f32.mxu0 0.0
        %1245 = vmatmul.mubr.f32.gmra.mrb[0].mxu0 %v781
        %v1246 = vpop.f32.mrb[0].mxu0
        %v1247 = vadd.f32 0.0, %v1246
        %v1248 = vpop.f32.mrb[0].mxu0
        %1249 = vmatprep.mubr.f32.mxu0 0.0
        %1250 = vmatmul.mubr.f32.gmra.mrb[0].mxu0 %v784
        %v1251 = vpop.f32.mrb[0].mxu0
        %v1252 = vadd.f32 0.0, %v1251
        %v1253 = vpop.f32.mrb[0].mxu0
        %1254 = vmatprep.mubr.f32.mxu0 0.0
        %1255 = vmatmul.mubr.f32.gmra.mrb[0].mxu0 %v787
        %v1256 = vpop.f32.mrb[0].mxu0
        %v1257 = vadd.f32 0.0, %v1256
        %v1258 = vpop.f32.mrb[0].mxu0
        %1259 = vmatprep.mubr.f32.mxu0 0.0
        %1260 = vmatmul.mubr.f32.gmra.mrb[0].mxu0 %v790
        %v1261 = vpop.f32.mrb[0].mxu0
        %v1262 = vadd.f32 0.0, %v1261
        %v1263 = vpop.f32.mrb[0].mxu0
        %1264 = vmatprep.mubr.f32.mxu0 0.0
        %1265 = vmatmul.mubr.f32.gmra.mrb[0].mxu0 %v793
        %v1266 = vpop.f32.mrb[0].mxu0
        %v1267 = vadd.f32 0.0, %v1266
        %v1268 = vpop.f32.mrb[0].mxu0
        %1269 = vmatprep.mubr.f32.mxu0 0.0
        %1270 = vmatmul.mubr.f32.gmra.mrb[0].mxu0 %v796
        %v1271 = vpop.f32.mrb[0].mxu0
        %v1272 = vadd.f32 0.0, %v1271
        %v1273 = vpop.f32.mrb[0].mxu0
        %1274 = vmatprep.mubr.f32.mxu0 0.0
        %1275 = vmatmul.mubr.f32.gmra.mrb[0].mxu0 %v799
        %v1276 = vpop.f32.mrb[0].mxu0
        %v1277 = vadd.f32 0.0, %v1276
        %v1278 = vpop.f32.mrb[0].mxu0
        %1279 = vmatprep.mubr.f32.mxu0 0.0
        %1280 = vmatmul.mubr.f32.gmra.mrb[0].mxu0 %v802
        %v1281 = vpop.f32.mrb[0].mxu0
        %v1282 = vadd.f32 0.0, %v1281
        %v1283 = vpop.f32.mrb[0].mxu0
        %1284 = vmatprep.mubr.f32.mxu0 0.0
        %1285 = vmatmul.mubr.f32.gmra.mrb[0].mxu0 %v805
        %v1286 = vpop.f32.mrb[0].mxu0
        %v1287 = vadd.f32 0.0, %v1286
        %v1288 = vpop.f32.mrb[0].mxu0
        %1289 = vmatprep.mubr.f32.mxu0 0.0
        %1290 = vmatmul.mubr.f32.gmra.mrb[0].mxu0 %v808
        %v1291 = vpop.f32.mrb[0].mxu0
        %v1292 = vadd.f32 0.0, %v1291
        %v1293 = vpop.f32.mrb[0].mxu0
        %1294 = vmatprep.mubr.f32.mxu0 0.0
        %1295 = vmatmul.mubr.f32.gmra.mrb[0].mxu0 %v811
        %v1296 = vpop.f32.mrb[0].mxu0
        %v1297 = vadd.f32 0.0, %v1296
        %v1298 = vpop.f32.mrb[0].mxu0
        %1299 = vmatprep.mubr.f32.mxu0 0.0
        %1300 = vmatmul.mubr.f32.gmra.mrb[0].mxu0 %v814
        %v1301 = vpop.f32.mrb[0].mxu0
        %v1302 = vadd.f32 0.0, %v1301
        %v1303 = vpop.f32.mrb[0].mxu0
        %1304 = vmatprep.mubr.f32.mxu0 0.0
        %1305 = vmatmul.mubr.f32.gmra.mrb[0].mxu0 %v817
        %v1306 = vpop.f32.mrb[0].mxu0
        %v1307 = vadd.f32 0.0, %v1306
        %v1308 = vpop.f32.mrb[0].mxu0
        %1309 = vmatprep.mubr.f32.mxu0 0.0
        %1310 = vmatmul.mubr.f32.gmra.mrb[0].mxu0 %v820
        %v1311 = vpop.f32.mrb[0].mxu0
        %v1312 = vadd.f32 0.0, %v1311
        %v1313 = vpop.f32.mrb[0].mxu0
        %1314 = vmatprep.mubr.f32.mxu0 0.0
        %1315 = vmatmul.mubr.f32.gmra.mrb[0].mxu0 %v823
        %v1316 = vpop.f32.mrb[0].mxu0
        %v1317 = vadd.f32 0.0, %v1316
        %v1318 = vpop.f32.mrb[0].mxu0
        %1319 = vmatprep.mubr.f32.mxu0 0.0
        %1320 = vmatmul.mubr.f32.gmra.mrb[0].mxu0 %v826
        %v1321 = vpop.f32.mrb[0].mxu0
        %v1322 = vadd.f32 0.0, %v1321
        %v1323 = vpop.f32.mrb[0].mxu0
        %1324 = vmatprep.mubr.f32.mxu0 0.0
        %1325 = vmatmul.mubr.f32.gmra.mrb[0].mxu0 %v829
        %v1326 = vpop.f32.mrb[0].mxu0
        %v1327 = vadd.f32 0.0, %v1326
        %v1328 = vpop.f32.mrb[0].mxu0
        %1329 = vmatprep.mubr.f32.mxu0 0.0
        %1330 = vmatmul.mubr.f32.gmra.mrb[0].mxu0 %v832
        %v1331 = vpop.f32.mrb[0].mxu0
        %v1332 = vadd.f32 0.0, %v1331
        %v1333 = vpop.f32.mrb[0].mxu0
        %1334 = vmatprep.mubr.f32.mxu0 0.0
        %1335 = vmatmul.mubr.f32.gmra.mrb[0].mxu0 %v835
        %v1336 = vpop.f32.mrb[0].mxu0
        %v1337 = vadd.f32 0.0, %v1336
        %v1338 = vpop.f32.mrb[0].mxu0
        %1339 = vmatprep.mubr.f32.mxu0 0.0
        %1340 = vmatmul.mubr.f32.gmra.mrb[0].mxu0 %v838
        %v1341 = vpop.f32.mrb[0].mxu0
        %v1342 = vadd.f32 0.0, %v1341
        %v1343 = vpop.f32.mrb[0].mxu0
        %1344 = vmatprep.mubr.f32.mxu0 0.0
        %1345 = vmatmul.mubr.f32.gmra.mrb[0].mxu0 %v841
        %v1346 = vpop.f32.mrb[0].mxu0
        %v1347 = vadd.f32 0.0, %v1346
        %v1348 = vpop.f32.mrb[0].mxu0
        %1349 = vmatprep.mubr.f32.mxu0 0.0
        %1350 = vmatmul.mubr.f32.gmra.mrb[0].mxu0 %v844
        %v1351 = vpop.f32.mrb[0].mxu0
        %v1352 = vadd.f32 0.0, %v1351
        %v1353 = vpop.f32.mrb[0].mxu0
        %1354 = vmatprep.mubr.f32.mxu0 0.0
        %1355 = vmatmul.mubr.f32.gmra.mrb[0].mxu0 %v847
        %v1356 = vpop.f32.mrb[0].mxu0
        %v1357 = vadd.f32 0.0, %v1356
        %v1358 = vpop.f32.mrb[0].mxu0
        %1359 = vmatprep.mubr.f32.mxu0 0.0
        %1360 = vmatmul.mubr.f32.gmra.mrb[0].mxu0 %v850
        %v1361 = vpop.f32.mrb[0].mxu0
        %v1362 = vadd.f32 0.0, %v1361
        %v1363 = vpop.f32.mrb[0].mxu0
        %1364 = vmatprep.mubr.f32.mxu0 0.0
        %1365 = vmatmul.mubr.f32.gmra.mrb[0].mxu0 %v853
        %v1366 = vpop.f32.mrb[0].mxu0
        %v1367 = vadd.f32 0.0, %v1366
        %v1368 = vpop.f32.mrb[0].mxu0
        %1369 = vmatprep.mubr.f32.mxu0 0.0
        %1370 = vmatmul.mubr.f32.gmra.mrb[0].mxu0 %v856
        %v1371 = vpop.f32.mrb[0].mxu0
        %v1372 = vadd.f32 0.0, %v1371
        %v1373 = vpop.f32.mrb[0].mxu0
        %1374 = vmatprep.mubr.f32.mxu0 0.0
        %1375 = vmatmul.mubr.f32.gmra.mrb[0].mxu0 %v859
        %v1376 = vpop.f32.mrb[0].mxu0
        %v1377 = vadd.f32 0.0, %v1376
        %v1378 = vpop.f32.mrb[0].mxu0
        %1379 = vmatprep.mubr.f32.mxu0 0.0
        %1380 = vmatmul.mubr.f32.gmra.mrb[0].mxu0 %v862
        %v1381 = vpop.f32.mrb[0].mxu0
        %v1382 = vadd.f32 0.0, %v1381
        %v1383 = vpop.f32.mrb[0].mxu0
        %1384 = vmatprep.mubr.f32.mxu0 0.0
        %1385 = vmatmul.mubr.f32.gmra.mrb[0].mxu0 %v865
        %v1386 = vpop.f32.mrb[0].mxu0
        %v1387 = vadd.f32 0.0, %v1386
        %v1388 = vpop.f32.mrb[0].mxu0
        %1389 = vmatprep.mubr.f32.mxu0 0.0
        %1390 = vmatmul.mubr.f32.gmra.mrb[0].mxu0 %v868
        %v1391 = vpop.f32.mrb[0].mxu0
        %v1392 = vadd.f32 0.0, %v1391
        %v1393 = vpop.f32.mrb[0].mxu0
        %1394 = vmatprep.mubr.f32.mxu0 0.0
        %1395 = vmatmul.mubr.f32.gmra.mrb[0].mxu0 %v871
        %v1396 = vpop.f32.mrb[0].mxu0
        %v1397 = vadd.f32 0.0, %v1396
        %v1398 = vpop.f32.mrb[0].mxu0
        %1399 = vmatprep.mubr.f32.mxu0 0.0
        %1400 = vmatmul.mubr.f32.gmra.mrb[0].mxu0 %v874
        %v1401 = vpop.f32.mrb[0].mxu0
        %v1402 = vadd.f32 0.0, %v1401
        %v1403 = vpop.f32.mrb[0].mxu0
        %1404 = vmatprep.mubr.f32.mxu0 0.0
        %1405 = vmatmul.mubr.f32.gmra.mrb[0].mxu0 %v877
        %v1406 = vpop.f32.mrb[0].mxu0
        %v1407 = vadd.f32 0.0, %v1406
        %v1408 = vpop.f32.mrb[0].mxu0
        %1409 = vmatprep.mubr.f32.mxu0 0.0
        %1410 = vmatmul.mubr.f32.gmra.mrb[0].mxu0 %v880
        %v1411 = vpop.f32.mrb[0].mxu0
        %v1412 = vadd.f32 0.0, %v1411
        %v1413 = vpop.f32.mrb[0].mxu0
        %1414 = vmatprep.mubr.f32.mxu0 0.0
        %1415 = vmatmul.mubr.f32.gmra.mrb[0].mxu0 %v883
        %v1416 = vpop.f32.mrb[0].mxu0
        %v1417 = vadd.f32 0.0, %v1416
        %v1418 = vpop.f32.mrb[0].mxu0
        %1419 = vmatprep.mubr.f32.mxu0 0.0
        %1420 = vmatmul.mubr.f32.gmra.mrb[0].mxu0 %v886
        %v1421 = vpop.f32.mrb[0].mxu0
        %v1422 = vadd.f32 0.0, %v1421
        %v1423 = vpop.f32.mrb[0].mxu0
        %1424 = vmatprep.mubr.f32.mxu0 0.0
        %1425 = vmatmul.mubr.f32.gmra.mrb[0].mxu0 %v889
        %v1426 = vpop.f32.mrb[0].mxu0
        %v1427 = vadd.f32 0.0, %v1426
        %v1428 = vpop.f32.mrb[0].mxu0
        %1429 = vmatprep.mubr.f32.mxu0 0.0
        %1430 = vmatmul.mubr.f32.gmra.mrb[0].mxu0 %v892
        %v1431 = vpop.f32.mrb[0].mxu0
        %v1432 = vadd.f32 0.0, %v1431
        %v1433 = vpop.f32.mrb[0].mxu0
        %1434 = vmatprep.mubr.f32.mxu0 0.0
        %1435 = vmatmul.mubr.f32.gmra.mrb[0].mxu0 %v895
        %v1436 = vpop.f32.mrb[0].mxu0
        %v1437 = vadd.f32 0.0, %v1436
        %v1438 = vpop.f32.mrb[0].mxu0
        %1439 = vmatprep.mubr.f32.mxu0 0.0
        %1440 = vmatmul.mubr.f32.gmra.mrb[0].mxu0 %v898
        %v1441 = vpop.f32.mrb[0].mxu0
        %v1442 = vadd.f32 0.0, %v1441
        %v1443 = vpop.f32.mrb[0].mxu0
        %1444 = vmatprep.mubr.f32.mxu0 0.0
        %1445 = vmatmul.mubr.f32.gmra.mrb[0].mxu0 %v901
        %v1446 = vpop.f32.mrb[0].mxu0
        %v1447 = vadd.f32 0.0, %v1446
        %v1448 = vpop.f32.mrb[0].mxu0
        %1449 = vmatprep.mubr.f32.mxu0 0.0
        %1450 = vmatmul.mubr.f32.gmra.mrb[0].mxu0 %v904
        %v1451 = vpop.f32.mrb[0].mxu0
        %v1452 = vadd.f32 0.0, %v1451
        %v1453 = vpop.f32.mrb[0].mxu0
        %1454 = vmatprep.mubr.f32.mxu0 0.0
        %1455 = vmatmul.mubr.f32.gmra.mrb[0].mxu0 %v907
        %v1456 = vpop.f32.mrb[0].mxu0
        %v1457 = vadd.f32 0.0, %v1456
        %v1458 = vpop.f32.mrb[0].mxu0
        %1459 = vmatprep.mubr.f32.mxu0 0.0
        %1460 = vmatmul.mubr.f32.gmra.mrb[0].mxu0 %v910
        %v1461 = vpop.f32.mrb[0].mxu0
        %v1462 = vadd.f32 0.0, %v1461
        %v1463 = vpop.f32.mrb[0].mxu0
        %1464 = vmatprep.mubr.f32.mxu0 0.0
        %1465 = vmatmul.mubr.f32.gmra.mrb[0].mxu0 %v913
        %v1466 = vpop.f32.mrb[0].mxu0
        %v1467 = vadd.f32 0.0, %v1466
        %v1468 = vpop.f32.mrb[0].mxu0
        %1469 = vmatprep.mubr.f32.mxu0 0.0
        %1470 = vmatmul.mubr.f32.gmra.mrb[0].mxu0 %v916
        %v1471 = vpop.f32.mrb[0].mxu0
        %v1472 = vadd.f32 0.0, %v1471
        %v1473 = vpop.f32.mrb[0].mxu0
        %1474 = vmatprep.mubr.f32.mxu0 0.0
        %1475 = vmatmul.mubr.f32.gmra.mrb[0].mxu0 %v919
        %v1476 = vpop.f32.mrb[0].mxu0
        %v1477 = vadd.f32 0.0, %v1476
        %v1478 = vpop.f32.mrb[0].mxu0
        %1479 = vmatprep.mubr.f32.mxu0 0.0
        %1480 = vmatmul.mubr.f32.gmra.mrb[0].mxu0 %v922
        %v1481 = vpop.f32.mrb[0].mxu0
        %v1482 = vadd.f32 0.0, %v1481
        %v1483 = vpop.f32.mrb[0].mxu0
        %1484 = vmatprep.mubr.f32.mxu0 0.0
        %1485 = vmatmul.mubr.f32.gmra.mrb[0].mxu0 %v925
        %v1486 = vpop.f32.mrb[0].mxu0
        %v1487 = vadd.f32 0.0, %v1486
        %v1488 = vpop.f32.mrb[0].mxu0
        %1489 = vmatprep.mubr.f32.mxu0 0.0
        %1490 = vmatmul.mubr.f32.gmra.mrb[0].mxu0 %v928
        %v1491 = vpop.f32.mrb[0].mxu0
        %v1492 = vadd.f32 0.0, %v1491
        %v1493 = vpop.f32.mrb[0].mxu0
        %1494 = vmatprep.mubr.f32.mxu0 0.0
        %1495 = vmatmul.mubr.f32.gmra.mrb[0].mxu0 %v931
        %v1496 = vpop.f32.mrb[0].mxu0
        %v1497 = vadd.f32 0.0, %v1496
        %v1498 = vpop.f32.mrb[0].mxu0
        %1499 = vmatprep.mubr.f32.mxu0 0.0
        %1500 = vmatmul.mubr.f32.gmra.mrb[0].mxu0 %v934
        %v1501 = vpop.f32.mrb[0].mxu0
        %v1502 = vadd.f32 0.0, %v1501
        %v1503 = vpop.f32.mrb[0].mxu0
        %1504 = vmatprep.mubr.f32.mxu0 0.0
        %1505 = vmatmul.mubr.f32.gmra.mrb[0].mxu0 %v937
        %v1506 = vpop.f32.mrb[0].mxu0
        %v1507 = vadd.f32 0.0, %v1506
        %v1508 = vpop.f32.mrb[0].mxu0
        %1509 = vmatprep.mubr.f32.mxu0 0.0
        %1510 = vmatmul.mubr.f32.gmra.mrb[0].mxu0 %v940
        %v1511 = vpop.f32.mrb[0].mxu0
        %v1512 = vadd.f32 0.0, %v1511
        %v1513 = vpop.f32.mrb[0].mxu0
        %1514 = vmatprep.mubr.f32.mxu0 0.0
        %1515 = vmatmul.mubr.f32.gmra.mrb[0].mxu0 %v943
        %v1516 = vpop.f32.mrb[0].mxu0
        %v1517 = vadd.f32 0.0, %v1516
        %v1518 = vpop.f32.mrb[0].mxu0
        %1519 = vmatprep.mubr.f32.mxu0 0.0
        %1520 = vmatmul.mubr.f32.gmra.mrb[0].mxu0 %v946
        %v1521 = vpop.f32.mrb[0].mxu0
        %v1522 = vadd.f32 0.0, %v1521
        %v1523 = vpop.f32.mrb[0].mxu0
        %1524 = vmatprep.mubr.f32.mxu0 0.0
        %1525 = vmatmul.mubr.f32.gmra.mrb[0].mxu0 %v949
        %v1526 = vpop.f32.mrb[0].mxu0
        %v1527 = vadd.f32 0.0, %v1526
        %v1528 = vpop.f32.mrb[0].mxu0
        %1529 = vmatprep.mubr.f32.mxu0 0.0
        %1530 = vmatmul.mubr.f32.gmra.mrb[0].mxu0 %v952
        %v1531 = vpop.f32.mrb[0].mxu0
        %v1532 = vadd.f32 0.0, %v1531
        %v1533 = vpop.f32.mrb[0].mxu0
        %1534 = vmatprep.mubr.f32.mxu0 0.0
        %1535 = vmatmul.mubr.f32.gmra.mrb[0].mxu0 %v955
        %v1536 = vpop.f32.mrb[0].mxu0
        %v1537 = vadd.f32 0.0, %v1536
        %v1538 = vpop.f32.mrb[0].mxu0
        %1539 = vmatprep.mubr.f32.mxu0 0.0
        %1540 = vmatmul.mubr.f32.gmra.mrb[0].mxu0 %v958
        %v1541 = vpop.f32.mrb[0].mxu0
        %v1542 = vadd.f32 0.0, %v1541
        %v1543 = vpop.f32.mrb[0].mxu0
        %1544 = vmatprep.mubr.f32.mxu0 0.0
        %1545 = vmatmul.mubr.f32.gmra.mrb[0].mxu0 %v961
        %v1546 = vpop.f32.mrb[0].mxu0
        %v1547 = vadd.f32 0.0, %v1546
        %v1548 = vpop.f32.mrb[0].mxu0
        %1549 = vmatprep.mubr.f32.mxu0 0.0
        %1550 = vmatmul.mubr.f32.gmra.mrb[0].mxu0 %v964
        %v1551 = vpop.f32.mrb[0].mxu0
        %v1552 = vadd.f32 0.0, %v1551
        %v1553 = vpop.f32.mrb[0].mxu0
        %1554 = vmatprep.mubr.f32.mxu0 0.0
        %1555 = vmatmul.mubr.f32.gmra.mrb[0].mxu0 %v967
        %v1556 = vpop.f32.mrb[0].mxu0
        %v1557 = vadd.f32 0.0, %v1556
        %v1558 = vpop.f32.mrb[0].mxu0
        %1559 = vmatprep.mubr.f32.mxu0 0.0
        %1560 = vmatmul.mubr.f32.gmra.mrb[0].mxu0 %v970
        %v1561 = vpop.f32.mrb[0].mxu0
        %v1562 = vadd.f32 0.0, %v1561
        %v1563 = vpop.f32.mrb[0].mxu0
        %1564 = vmatprep.mubr.f32.mxu0 0.0
        %1565 = vmatmul.mubr.f32.gmra.mrb[0].mxu0 %v973
        %v1566 = vpop.f32.mrb[0].mxu0
        %v1567 = vadd.f32 0.0, %v1566
        %v1568 = vpop.f32.mrb[0].mxu0
        %1569 = vmatprep.mubr.f32.mxu0 0.0
        %1570 = vmatmul.mubr.f32.gmra.mrb[0].mxu0 %v976
        %v1571 = vpop.f32.mrb[0].mxu0
        %v1572 = vadd.f32 0.0, %v1571
        %v1573 = vpop.f32.mrb[0].mxu0
        %1574 = vmatprep.mubr.f32.mxu0 0.0
        %1575 = vmatmul.mubr.f32.gmra.mrb[0].mxu0 %v979
        %v1576 = vpop.f32.mrb[0].mxu0
        %v1577 = vadd.f32 0.0, %v1576
        %v1578 = vpop.f32.mrb[0].mxu0
        %1579 = vmatprep.mubr.f32.mxu0 0.0
        %1580 = vmatmul.mubr.f32.gmra.mrb[0].mxu0 %v982
        %v1581 = vpop.f32.mrb[0].mxu0
        %v1582 = vadd.f32 0.0, %v1581
        %v1583 = vpop.f32.mrb[0].mxu0
        %1584 = vmatprep.mubr.f32.mxu0 0.0
        %1585 = vmatmul.mubr.f32.gmra.mrb[0].mxu0 %v985
        %v1586 = vpop.f32.mrb[0].mxu0
        %v1587 = vadd.f32 0.0, %v1586
        %v1588 = vpop.f32.mrb[0].mxu0
        %1589 = vmatprep.mubr.f32.mxu0 0.0
        %1590 = vmatmul.mubr.f32.gmra.mrb[0].mxu0 %v988
        %v1591 = vpop.f32.mrb[0].mxu0
        %v1592 = vadd.f32 0.0, %v1591
        %v1593 = vpop.f32.mrb[0].mxu0
        %1594 = vmatprep.mubr.f32.mxu0 0.0
        %1595 = vmatmul.mubr.f32.gmra.mrb[0].mxu0 %v991
        %v1596 = vpop.f32.mrb[0].mxu0
        %v1597 = vadd.f32 0.0, %v1596
        %v1598 = vpop.f32.mrb[0].mxu0
        %1599 = vmatprep.mubr.f32.mxu0 0.0
        %1600 = vmatmul.mubr.f32.gmra.mrb[0].mxu0 %v994
        %v1601 = vpop.f32.mrb[0].mxu0
        %v1602 = vadd.f32 0.0, %v1601
        %v1603 = vpop.f32.mrb[0].mxu0
        %1604 = vmatprep.mubr.f32.mxu0 0.0
        %1605 = vmatmul.mubr.f32.gmra.mrb[0].mxu0 %v997
        %v1606 = vpop.f32.mrb[0].mxu0
        %v1607 = vadd.f32 0.0, %v1606
        %v1608 = vpop.f32.mrb[0].mxu0
        %1609 = vmatprep.mubr.f32.mxu0 0.0
        %1610 = vmatmul.mubr.f32.gmra.mrb[0].mxu0 %v1000
        %v1611 = vpop.f32.mrb[0].mxu0
        %v1612 = vadd.f32 0.0, %v1611
        %v1613 = vpop.f32.mrb[0].mxu0
        %1614 = vmatprep.mubr.f32.mxu0 0.0
        %1615 = vmatmul.mubr.f32.gmra.mrb[0].mxu0 %v1003
        %v1616 = vpop.f32.mrb[0].mxu0
        %v1617 = vadd.f32 0.0, %v1616
        %v1618 = vpop.f32.mrb[0].mxu0
        %1619 = vmatprep.mubr.f32.mxu0 0.0
        %1620 = vmatmul.mubr.f32.gmra.mrb[0].mxu0 %v1006
        %v1621 = vpop.f32.mrb[0].mxu0
        %v1622 = vadd.f32 0.0, %v1621
        %v1623 = vpop.f32.mrb[0].mxu0
        %1624 = vmatprep.mubr.f32.mxu0 0.0
        %1625 = vmatmul.mubr.f32.gmra.mrb[0].mxu0 %v1009
        %v1626 = vpop.f32.mrb[0].mxu0
        %v1627 = vadd.f32 0.0, %v1626
        %v1628 = vpop.f32.mrb[0].mxu0
        %1629 = vmatprep.mubr.f32.mxu0 0.0
        %1630 = vmatmul.mubr.f32.gmra.mrb[0].mxu0 %v1012
        %v1631 = vpop.f32.mrb[0].mxu0
        %v1632 = vadd.f32 0.0, %v1631
        %v1633 = vpop.f32.mrb[0].mxu0
        %1634 = vmatprep.mubr.f32.mxu0 0.0
        %1635 = vmatmul.mubr.f32.gmra.mrb[0].mxu0 %v1015
        %v1636 = vpop.f32.mrb[0].mxu0
        %v1637 = vadd.f32 0.0, %v1636
        %v1638 = vpop.f32.mrb[0].mxu0
        %1639 = vmatprep.mubr.f32.mxu0 0.0
        %1640 = vmatmul.mubr.f32.gmra.mrb[0].mxu0 %v1018
        %v1641 = vpop.f32.mrb[0].mxu0
        %v1642 = vadd.f32 0.0, %v1641
        %v1643 = vpop.f32.mrb[0].mxu0
        %1644 = vmatprep.mubr.f32.mxu0 0.0
        %1645 = vmatmul.mubr.f32.gmra.mrb[0].mxu0 %v1021
        %v1646 = vpop.f32.mrb[0].mxu0
        %v1647 = vadd.f32 0.0, %v1646
        %v1648 = vpop.f32.mrb[0].mxu0
        %1649 = vmatprep.mubr.f32.mxu0 0.0
        %1650 = vmatmul.mubr.f32.gmra.mrb[0].mxu0 %v1024
        %v1651 = vpop.f32.mrb[0].mxu0
        %v1652 = vadd.f32 0.0, %v1651
        %v1653 = vpop.f32.mrb[0].mxu0
        %1654 = vmatprep.mubr.f32.mxu0 0.0
        %1655 = vmatmul.mubr.f32.gmra.mrb[0].mxu0 %v1027
        %v1656 = vpop.f32.mrb[0].mxu0
        %v1657 = vadd.f32 0.0, %v1656
        %v1658 = vpop.f32.mrb[0].mxu0
        %1659 = vmatprep.mubr.f32.mxu0 0.0
        %1660 = vmatmul.mubr.f32.gmra.mrb[0].mxu0 %v1030
        %v1661 = vpop.f32.mrb[0].mxu0
        %v1662 = vadd.f32 0.0, %v1661
        %v1663 = vpop.f32.mrb[0].mxu0
        %1664 = vmatprep.mubr.f32.mxu0 0.0
        %1665 = vmatmul.mubr.f32.gmra.mrb[0].mxu0 %v1033
        %v1666 = vpop.f32.mrb[0].mxu0
        %v1667 = vadd.f32 0.0, %v1666
        %v1668 = vpop.f32.mrb[0].mxu0
        %1669 = vmatprep.mubr.f32.mxu0 0.0
        %1670 = vmatmul.mubr.f32.gmra.mrb[0].mxu0 %v1036
        %v1671 = vpop.f32.mrb[0].mxu0
        %v1672 = vadd.f32 0.0, %v1671
        %v1673 = vpop.f32.mrb[0].mxu0
        %1674 = vmatprep.mubr.f32.mxu0 0.0
        %1675 = vmatmul.mubr.f32.gmra.mrb[0].mxu0 %v1039
        %v1676 = vpop.f32.mrb[0].mxu0
        %v1677 = vadd.f32 0.0, %v1676
        %v1678 = vpop.f32.mrb[0].mxu0
        %1679 = vmatprep.mubr.f32.mxu0 0.0
        %1680 = vmatmul.mubr.f32.gmra.mrb[0].mxu0 %v1042
        %v1681 = vpop.f32.mrb[0].mxu0
        %v1682 = vadd.f32 0.0, %v1681
        %v1683 = vpop.f32.mrb[0].mxu0
        %1684 = vmatprep.mubr.f32.mxu0 0.0
        %1685 = vmatmul.mubr.f32.gmra.mrb[0].mxu0 %v1045
        %v1686 = vpop.f32.mrb[0].mxu0
        %v1687 = vadd.f32 0.0, %v1686
        %v1688 = vpop.f32.mrb[0].mxu0
        %1689 = vmatprep.mubr.f32.mxu0 0.0
        %1690 = vmatmul.mubr.f32.gmra.mrb[0].mxu0 %v1048
        %v1691 = vpop.f32.mrb[0].mxu0
        %v1692 = vadd.f32 0.0, %v1691
        %v1693 = vpop.f32.mrb[0].mxu0
        %1694 = vmatprep.mubr.f32.mxu0 0.0
        %1695 = vmatmul.mubr.f32.gmra.mrb[0].mxu0 %v1051
        %v1696 = vpop.f32.mrb[0].mxu0
        %v1697 = vadd.f32 0.0, %v1696
        %v1698 = vpop.f32.mrb[0].mxu0
        %1699 = vmatprep.mubr.f32.mxu0 0.0
        %1700 = vmatmul.mubr.f32.gmra.mrb[0].mxu0 %v1054
        %v1701 = vpop.f32.mrb[0].mxu0
        %v1702 = vadd.f32 0.0, %v1701
        %v1703 = vpop.f32.mrb[0].mxu0
        %1704 = vmatprep.mubr.f32.mxu0 0.0
        %1705 = vmatmul.mubr.f32.gmra.mrb[0].mxu0 %v1057
        %v1706 = vpop.f32.mrb[0].mxu0
        %v1707 = vadd.f32 0.0, %v1706
        %v1708 = vpop.f32.mrb[0].mxu0
        %1709 = vmatprep.mubr.f32.mxu0 0.0
        %1710 = vmatmul.mubr.f32.gmra.mrb[0].mxu0 %v1060
        %v1711 = vpop.f32.mrb[0].mxu0
        %v1712 = vadd.f32 0.0, %v1711
        %v1713 = vpop.f32.mrb[0].mxu0
        %1714 = vmatprep.mubr.f32.mxu0 0.0
        %1715 = vmatmul.mubr.f32.gmra.mrb[0].mxu0 %v1063
        %v1716 = vpop.f32.mrb[0].mxu0
        %v1717 = vadd.f32 0.0, %v1716
        %v1718 = vpop.f32.mrb[0].mxu0
        %1719 = vmatprep.mubr.f32.mxu0 0.0
        %1720 = vmatmul.mubr.f32.gmra.mrb[0].mxu0 %v1066
        %v1721 = vpop.f32.mrb[0].mxu0
        %v1722 = vadd.f32 0.0, %v1721
        %v1723 = vpop.f32.mrb[0].mxu0
        %1724 = vmatprep.mubr.f32.mxu0 0.0
        %1725 = vmatmul.mubr.f32.gmra.mrb[0].mxu0 %v1069
        %v1726 = vpop.f32.mrb[0].mxu0
        %v1727 = vadd.f32 0.0, %v1726
        %v1728 = vpop.f32.mrb[0].mxu0
        %1729 = vmatprep.mubr.f32.mxu0 0.0
        %1730 = vmatmul.mubr.f32.gmra.mrb[0].mxu0 %v1072
        %v1731 = vpop.f32.mrb[0].mxu0
        %v1732 = vadd.f32 0.0, %v1731
        %v1733 = vpop.f32.mrb[0].mxu0
        %1734 = vmatprep.mubr.f32.mxu0 0.0
        %1735 = vmatmul.mubr.f32.gmra.mrb[0].mxu0 %v1075
        %v1736 = vpop.f32.mrb[0].mxu0
        %v1737 = vadd.f32 0.0, %v1736
        %v1738 = vpop.f32.mrb[0].mxu0
        %1739 = vmatprep.mubr.f32.mxu0 0.0
        %1740 = vmatmul.mubr.f32.gmra.mrb[0].mxu0 %v1078
        %v1741 = vpop.f32.mrb[0].mxu0
        %v1742 = vadd.f32 0.0, %v1741
        %v1743 = vpop.f32.mrb[0].mxu0
        %1744 = vmatprep.mubr.f32.mxu0 0.0
        %1745 = vmatmul.mubr.f32.gmra.mrb[0].mxu0 %v1081
        %v1746 = vpop.f32.mrb[0].mxu0
        %v1747 = vadd.f32 0.0, %v1746
        %v1748 = vpop.f32.mrb[0].mxu0
        %1749 = vmatprep.mubr.f32.mxu0 0.0
        %1750 = vmatmul.mubr.f32.gmra.mrb[0].mxu0 %v1084
        %v1751 = vpop.f32.mrb[0].mxu0
        %v1752 = vadd.f32 0.0, %v1751
        %v1753 = vpop.f32.mrb[0].mxu0
        %1754 = vmatprep.mubr.f32.mxu0 0.0
        %1755 = vmatmul.mubr.f32.gmra.mrb[0].mxu0 %v1087
        %v1756 = vpop.f32.mrb[0].mxu0
        %v1757 = vadd.f32 0.0, %v1756
        %v1758 = vpop.f32.mrb[0].mxu0
        %1759 = vmatprep.mubr.f32.mxu0 0.0
        %1760 = vmatmul.mubr.f32.gmra.mrb[0].mxu0 %v1090
        %v1761 = vpop.f32.mrb[0].mxu0
        %v1762 = vadd.f32 0.0, %v1761
        %v1763 = vpop.f32.mrb[0].mxu0
        %1764 = vmatprep.mubr.f32.mxu0 0.0
        %1765 = vmatmul.mubr.f32.gmra.mrb[0].mxu0 %v1093
        %v1766 = vpop.f32.mrb[0].mxu0
        %v1767 = vadd.f32 0.0, %v1766
        %v1768 = vpop.f32.mrb[0].mxu0
        %1769 = vmatprep.mubr.f32.mxu0 0.0
        %1770 = vmatmul.mubr.f32.gmra.mrb[0].mxu0 %v1096
        %v1771 = vpop.f32.mrb[0].mxu0
        %v1772 = vadd.f32 0.0, %v1771
        %v1773 = vpop.f32.mrb[0].mxu0
        %1774 = vmatprep.mubr.f32.mxu0 0.0
        %1775 = vmatmul.mubr.f32.gmra.mrb[0].mxu0 %v1099
        %v1776 = vpop.f32.mrb[0].mxu0
        %v1777 = vadd.f32 0.0, %v1776
        %v1778 = vpop.f32.mrb[0].mxu0
        %1779 = vmatprep.mubr.f32.mxu0 0.0
        %1780 = vmatmul.mubr.f32.gmra.mrb[0].mxu0 %v1102
        %v1781 = vpop.f32.mrb[0].mxu0
        %v1782 = vadd.f32 0.0, %v1781
        %v1783 = vpop.f32.mrb[0].mxu0
        %1784 = vmatprep.mubr.f32.mxu0 0.0
        %1785 = vmatmul.mubr.f32.gmra.mrb[0].mxu0 %v1105
        %v1786 = vpop.f32.mrb[0].mxu0
        %v1787 = vadd.f32 0.0, %v1786
        %v1788 = vpop.f32.mrb[0].mxu0
        %1789 = vmatprep.mubr.f32.mxu0 0.0
        %1790 = vmatmul.mubr.f32.gmra.mrb[0].mxu0 %v1108
        %v1791 = vpop.f32.mrb[0].mxu0
        %v1792 = vadd.f32 0.0, %v1791
        %v1793 = vpop.f32.mrb[0].mxu0
        %1794 = vmatprep.mubr.f32.mxu0 0.0
        %1795 = vmatmul.mubr.f32.gmra.mrb[0].mxu0 %v1111
        %v1796 = vpop.f32.mrb[0].mxu0
        %v1797 = vadd.f32 0.0, %v1796
        %v1798 = vpop.f32.mrb[0].mxu0
        %1799 = vmatprep.mubr.f32.mxu0 0.0
        %1800 = vmatmul.mubr.f32.gmra.mrb[0].mxu0 %v1114
        %v1801 = vpop.f32.mrb[0].mxu0
        %v1802 = vadd.f32 0.0, %v1801
        %v1803 = vpop.f32.mrb[0].mxu0
        %1804 = vmatprep.mubr.f32.mxu0 0.0
        %1805 = vmatmul.mubr.f32.gmra.mrb[0].mxu0 %v1117
        %v1806 = vpop.f32.mrb[0].mxu0
        %v1807 = vadd.f32 0.0, %v1806
        %v1808 = vpop.f32.mrb[0].mxu0
        %1809 = vmatprep.mubr.f32.mxu0 0.0
        %1810 = vmatmul.mubr.f32.gmra.mrb[0].mxu0 %v1120
        %v1811 = vpop.f32.mrb[0].mxu0
        %v1812 = vadd.f32 0.0, %v1811
        %v1813 = vpop.f32.mrb[0].mxu0
        %1814 = vmatprep.mubr.f32.mxu0 0.0
        %1815 = vmatmul.mubr.f32.gmra.mrb[0].mxu0 %v1123
        %v1816 = vpop.f32.mrb[0].mxu0
        %v1817 = vadd.f32 0.0, %v1816
        %v1818 = vpop.f32.mrb[0].mxu0
        %1819 = vmatprep.mubr.f32.mxu0 0.0
        %1820 = vmatmul.mubr.f32.gmra.mrb[0].mxu0 %v1126
        %v1821 = vpop.f32.mrb[0].mxu0
        %v1822 = vadd.f32 0.0, %v1821
        %v1823 = vpop.f32.mrb[0].mxu0
        %1824 = vmatprep.mubr.f32.mxu0 0.0
        %1825 = vmatmul.mubr.f32.gmra.mrb[0].mxu0 %v1129
        %v1826 = vpop.f32.mrb[0].mxu0
        %v1827 = vadd.f32 0.0, %v1826
        %v1828 = vpop.f32.mrb[0].mxu0
        %1829 = vmatprep.mubr.f32.mxu0 0.0
        %1830 = vmatmul.mubr.f32.gmra.mrb[0].mxu0 %v1132
        %v1831 = vpop.f32.mrb[0].mxu0
        %v1832 = vadd.f32 0.0, %v1831
        %v1833 = vpop.f32.mrb[0].mxu0
        %1834 = vmatprep.mubr.f32.mxu0 0.0
        %1835 = vmatmul.mubr.f32.gmra.mrb[0].mxu0 %v1135
        %v1836 = vpop.f32.mrb[0].mxu0
        %v1837 = vadd.f32 0.0, %v1836
        %v1838 = vpop.f32.mrb[0].mxu0
        %1839 = vmatprep.mubr.f32.mxu0 0.0
        %1840 = vmatmul.mubr.f32.gmra.mrb[0].mxu0 %v1138
        %v1841 = vpop.f32.mrb[0].mxu0
        %v1842 = vadd.f32 0.0, %v1841
        %v1843 = vpop.f32.mrb[0].mxu0
        %1844 = vdwg.mxu0
        %vm1845 = vcmask 64512
        %v1846 = vsel %vm1845, %v1207, 0.0
        %v1847 = vsel %vm1845, %v1287, 0.0
        %v1848 = vadd.f32 %v1846, %v1847
        %v1849 = vsel %vm1845, %v1212, 0.0
        %v1850 = vsel %vm1845, %v1292, 0.0
        %v1851 = vadd.f32 %v1849, %v1850
        %v1852 = vsel %vm1845, %v1217, 0.0
        %v1853 = vsel %vm1845, %v1297, 0.0
        %v1854 = vadd.f32 %v1852, %v1853
        %v1855 = vsel %vm1845, %v1222, 0.0
        %v1856 = vsel %vm1845, %v1302, 0.0
        %v1857 = vadd.f32 %v1855, %v1856
        %v1858 = vsel %vm1845, %v1227, 0.0
        %v1859 = vsel %vm1845, %v1307, 0.0
        %v1860 = vadd.f32 %v1858, %v1859
        %v1861 = vsel %vm1845, %v1232, 0.0
        %v1862 = vsel %vm1845, %v1312, 0.0
        %v1863 = vadd.f32 %v1861, %v1862
        %v1864 = vsel %vm1845, %v1237, 0.0
        %v1865 = vsel %vm1845, %v1317, 0.0
        %v1866 = vadd.f32 %v1864, %v1865
        %v1867 = vsel %vm1845, %v1242, 0.0
        %v1868 = vsel %vm1845, %v1322, 0.0
        %v1869 = vadd.f32 %v1867, %v1868
        %v1870 = vsel %vm1845, %v1247, 0.0
        %v1871 = vsel %vm1845, %v1327, 0.0
        %v1872 = vadd.f32 %v1870, %v1871
        %v1873 = vsel %vm1845, %v1252, 0.0
        %v1874 = vsel %vm1845, %v1332, 0.0
        %v1875 = vadd.f32 %v1873, %v1874
        %v1876 = vsel %vm1845, %v1257, 0.0
        %v1877 = vsel %vm1845, %v1337, 0.0
        %v1878 = vadd.f32 %v1876, %v1877
        %v1879 = vsel %vm1845, %v1262, 0.0
        %v1880 = vsel %vm1845, %v1342, 0.0
        %v1881 = vadd.f32 %v1879, %v1880
        %v1882 = vsel %vm1845, %v1267, 0.0
        %v1883 = vsel %vm1845, %v1347, 0.0
        %v1884 = vadd.f32 %v1882, %v1883
        %v1885 = vsel %vm1845, %v1272, 0.0
        %v1886 = vsel %vm1845, %v1352, 0.0
        %v1887 = vadd.f32 %v1885, %v1886
        %v1888 = vsel %vm1845, %v1277, 0.0
        %v1889 = vsel %vm1845, %v1357, 0.0
        %v1890 = vadd.f32 %v1888, %v1889
        %v1891 = vsel %vm1845, %v1282, 0.0
        %v1892 = vsel %vm1845, %v1362, 0.0
        %v1893 = vadd.f32 %v1891, %v1892
        %v1894 = vsel %vm1845, %v1367, 0.0
        %v1895 = vsel %vm1845, %v1447, 0.0
        %v1896 = vadd.f32 %v1894, %v1895
        %v1897 = vsel %vm1845, %v1372, 0.0
        %v1898 = vsel %vm1845, %v1452, 0.0
        %v1899 = vadd.f32 %v1897, %v1898
        %v1900 = vsel %vm1845, %v1377, 0.0
        %v1901 = vsel %vm1845, %v1457, 0.0
        %v1902 = vadd.f32 %v1900, %v1901
        %v1903 = vsel %vm1845, %v1382, 0.0
        %v1904 = vsel %vm1845, %v1462, 0.0
        %v1905 = vadd.f32 %v1903, %v1904
        %v1906 = vsel %vm1845, %v1387, 0.0
        %v1907 = vsel %vm1845, %v1467, 0.0
        %v1908 = vadd.f32 %v1906, %v1907
        %v1909 = vsel %vm1845, %v1392, 0.0
        %v1910 = vsel %vm1845, %v1472, 0.0
        %v1911 = vadd.f32 %v1909, %v1910
        %v1912 = vsel %vm1845, %v1397, 0.0
        %v1913 = vsel %vm1845, %v1477, 0.0
        %v1914 = vadd.f32 %v1912, %v1913
        %v1915 = vsel %vm1845, %v1402, 0.0
        %v1916 = vsel %vm1845, %v1482, 0.0
        %v1917 = vadd.f32 %v1915, %v1916
        %v1918 = vsel %vm1845, %v1407, 0.0
        %v1919 = vsel %vm1845, %v1487, 0.0
        %v1920 = vadd.f32 %v1918, %v1919
        %v1921 = vsel %vm1845, %v1412, 0.0
        %v1922 = vsel %vm1845, %v1492, 0.0
        %v1923 = vadd.f32 %v1921, %v1922
        %v1924 = vsel %vm1845, %v1417, 0.0
        %v1925 = vsel %vm1845, %v1497, 0.0
        %v1926 = vadd.f32 %v1924, %v1925
        %v1927 = vsel %vm1845, %v1422, 0.0
        %v1928 = vsel %vm1845, %v1502, 0.0
        %v1929 = vadd.f32 %v1927, %v1928
        %v1930 = vsel %vm1845, %v1427, 0.0
        %v1931 = vsel %vm1845, %v1507, 0.0
        %v1932 = vadd.f32 %v1930, %v1931
        %v1933 = vsel %vm1845, %v1432, 0.0
        %v1934 = vsel %vm1845, %v1512, 0.0
        %v1935 = vadd.f32 %v1933, %v1934
        %v1936 = vsel %vm1845, %v1437, 0.0
        %v1937 = vsel %vm1845, %v1517, 0.0
        %v1938 = vadd.f32 %v1936, %v1937
        %v1939 = vsel %vm1845, %v1442, 0.0
        %v1940 = vsel %vm1845, %v1522, 0.0
        %v1941 = vadd.f32 %v1939, %v1940
        %v1942 = vsel %vm1845, %v1527, 0.0
        %v1943 = vsel %vm1845, %v1607, 0.0
        %v1944 = vadd.f32 %v1942, %v1943
        %v1945 = vsel %vm1845, %v1532, 0.0
        %v1946 = vsel %vm1845, %v1612, 0.0
        %v1947 = vadd.f32 %v1945, %v1946
        %v1948 = vsel %vm1845, %v1537, 0.0
        %v1949 = vsel %vm1845, %v1617, 0.0
        %v1950 = vadd.f32 %v1948, %v1949
        %v1951 = vsel %vm1845, %v1542, 0.0
        %v1952 = vsel %vm1845, %v1622, 0.0
        %v1953 = vadd.f32 %v1951, %v1952
        %v1954 = vsel %vm1845, %v1547, 0.0
        %v1955 = vsel %vm1845, %v1627, 0.0
        %v1956 = vadd.f32 %v1954, %v1955
        %v1957 = vsel %vm1845, %v1552, 0.0
        %v1958 = vsel %vm1845, %v1632, 0.0
        %v1959 = vadd.f32 %v1957, %v1958
        %v1960 = vsel %vm1845, %v1557, 0.0
        %v1961 = vsel %vm1845, %v1637, 0.0
        %v1962 = vadd.f32 %v1960, %v1961
        %v1963 = vsel %vm1845, %v1562, 0.0
        %v1964 = vsel %vm1845, %v1642, 0.0
        %v1965 = vadd.f32 %v1963, %v1964
        %v1966 = vsel %vm1845, %v1567, 0.0
        %v1967 = vsel %vm1845, %v1647, 0.0
        %v1968 = vadd.f32 %v1966, %v1967
        %v1969 = vsel %vm1845, %v1572, 0.0
        %v1970 = vsel %vm1845, %v1652, 0.0
        %v1971 = vadd.f32 %v1969, %v1970
        %v1972 = vsel %vm1845, %v1577, 0.0
        %v1973 = vsel %vm1845, %v1657, 0.0
        %v1974 = vadd.f32 %v1972, %v1973
        %v1975 = vsel %vm1845, %v1582, 0.0
        %v1976 = vsel %vm1845, %v1662, 0.0
        %v1977 = vadd.f32 %v1975, %v1976
        %v1978 = vsel %vm1845, %v1587, 0.0
        %v1979 = vsel %vm1845, %v1667, 0.0
        %v1980 = vadd.f32 %v1978, %v1979
        %v1981 = vsel %vm1845, %v1592, 0.0
        %v1982 = vsel %vm1845, %v1672, 0.0
        %v1983 = vadd.f32 %v1981, %v1982
        %v1984 = vsel %vm1845, %v1597, 0.0
        %v1985 = vsel %vm1845, %v1677, 0.0
        %v1986 = vadd.f32 %v1984, %v1985
        %v1987 = vsel %vm1845, %v1602, 0.0
        %v1988 = vsel %vm1845, %v1682, 0.0
        %v1989 = vadd.f32 %v1987, %v1988
        %v1990 = vsel %vm1845, %v1687, 0.0
        %v1991 = vsel %vm1845, %v1767, 0.0
        %v1992 = vadd.f32 %v1990, %v1991
        %v1993 = vsel %vm1845, %v1692, 0.0
        %v1994 = vsel %vm1845, %v1772, 0.0
        %v1995 = vadd.f32 %v1993, %v1994
        %v1996 = vsel %vm1845, %v1697, 0.0
        %v1997 = vsel %vm1845, %v1777, 0.0
        %v1998 = vadd.f32 %v1996, %v1997
        %v1999 = vsel %vm1845, %v1702, 0.0
        %v2000 = vsel %vm1845, %v1782, 0.0
        %v2001 = vadd.f32 %v1999, %v2000
        %v2002 = vsel %vm1845, %v1707, 0.0
        %v2003 = vsel %vm1845, %v1787, 0.0
        %v2004 = vadd.f32 %v2002, %v2003
        %v2005 = vsel %vm1845, %v1712, 0.0
        %v2006 = vsel %vm1845, %v1792, 0.0
        %v2007 = vadd.f32 %v2005, %v2006
        %v2008 = vsel %vm1845, %v1717, 0.0
        %v2009 = vsel %vm1845, %v1797, 0.0
        %v2010 = vadd.f32 %v2008, %v2009
        %v2011 = vsel %vm1845, %v1722, 0.0
        %v2012 = vsel %vm1845, %v1802, 0.0
        %v2013 = vadd.f32 %v2011, %v2012
        %v2014 = vsel %vm1845, %v1727, 0.0
        %v2015 = vsel %vm1845, %v1807, 0.0
        %v2016 = vadd.f32 %v2014, %v2015
        %v2017 = vsel %vm1845, %v1732, 0.0
        %v2018 = vsel %vm1845, %v1812, 0.0
        %v2019 = vadd.f32 %v2017, %v2018
        %v2020 = vsel %vm1845, %v1737, 0.0
        %v2021 = vsel %vm1845, %v1817, 0.0
        %v2022 = vadd.f32 %v2020, %v2021
        %v2023 = vsel %vm1845, %v1742, 0.0
        %v2024 = vsel %vm1845, %v1822, 0.0
        %v2025 = vadd.f32 %v2023, %v2024
        %v2026 = vsel %vm1845, %v1747, 0.0
        %v2027 = vsel %vm1845, %v1827, 0.0
        %v2028 = vadd.f32 %v2026, %v2027
        %v2029 = vsel %vm1845, %v1752, 0.0
        %v2030 = vsel %vm1845, %v1832, 0.0
        %v2031 = vadd.f32 %v2029, %v2030
        %v2032 = vsel %vm1845, %v1757, 0.0
        %v2033 = vsel %vm1845, %v1837, 0.0
        %v2034 = vadd.f32 %v2032, %v2033
        %v2035 = vsel %vm1845, %v1762, 0.0
        %v2036 = vsel %vm1845, %v1842, 0.0
        %v2037 = vadd.f32 %v2035, %v2036
        %v2038 = vld [vmem:[%s255] sm:$0x1f]
        %v2039 = vld [vmem:[%s255 + $0x8] sm:$0x1f]
        %v2040 = vld [vmem:[%s255 + $0x10] sm:$0x1f]
        %v2041 = vld [vmem:[%s255 + $0x18] sm:$0x1f]
        %v2043 = vsel %vm1845, %v2038, 0
        %v2046 = vsel %vm1845, %v1848, 0
        %v2049 = vsel %vm1845, %v1851, 0
        %v2052 = vsel %vm1845, %v1854, 0
        %v2055 = vsel %vm1845, %v1857, 0
        %v2058 = vsel %vm1845, %v1860, 0
        %v2061 = vsel %vm1845, %v1863, 0
        %v2064 = vsel %vm1845, %v1866, 0
        %v2067 = vsel %vm1845, %v1869, 0
        %v2070 = vsel %vm1845, %v1872, 0
        %v2073 = vsel %vm1845, %v1875, 0
        %v2076 = vsel %vm1845, %v1878, 0
        %v2079 = vsel %vm1845, %v1881, 0
        %v2082 = vsel %vm1845, %v1884, 0
        %v2085 = vsel %vm1845, %v1887, 0
        %v2088 = vsel %vm1845, %v1890, 0
        %v2091 = vsel %vm1845, %v1893, 0
        %2093 = vmatprep.subr.mxu0 0.0
        %2094 = vmatpush1.xpose.msra.mxu0 %v2046
        %2095 = vmatprep.subr.mxu0 0.0
        %2096 = vmatpush1.xpose.msra.mxu0 %v2049
        %2097 = vmatprep.subr.mxu0 0.0
        %2098 = vmatpush1.xpose.msra.mxu0 %v2052
        %2099 = vmatprep.subr.mxu0 0.0
        %2100 = vmatpush1.xpose.msra.mxu0 %v2055
        %2101 = vmatprep.subr.mxu0 0.0
        %2102 = vmatpush1.xpose.msra.mxu0 %v2058
        %2103 = vmatprep.subr.mxu0 0.0
        %2104 = vmatpush1.xpose.msra.mxu0 %v2061
        %2105 = vmatprep.subr.mxu0 0.0
        %2106 = vmatpush1.xpose.msra.mxu0 %v2064
        %2107 = vmatprep.subr.mxu0 0.0
        %2108 = vmatpush1.xpose.msra.mxu0 %v2067
        %2109 = vmatprep.subr.mxu0 0.0
        %2110 = vmatpush1.xpose.msra.mxu0 %v2070
        %2111 = vmatprep.subr.mxu0 0.0
        %2112 = vmatpush1.xpose.msra.mxu0 %v2073
        %2113 = vmatprep.subr.mxu0 0.0
        %2114 = vmatpush1.xpose.msra.mxu0 %v2076
        %2115 = vmatprep.subr.mxu0 0.0
        %2116 = vmatpush1.xpose.msra.mxu0 %v2079
        %2117 = vmatprep.subr.mxu0 0.0
        %2118 = vmatpush1.xpose.msra.mxu0 %v2082
        %2119 = vmatprep.subr.mxu0 0.0
        %2120 = vmatpush1.xpose.msra.mxu0 %v2085
        %2121 = vmatprep.subr.mxu0 0.0
        %2122 = vmatpush1.xpose.msra.mxu0 %v2088
        %2123 = vmatprep.subr.mxu0 0.0
        %2124 = vmatpush1.xpose.msra.mxu0 %v2091
        %2125 = vmatprep.subr.mxu0 0.0
        %2126 = vmatpush1.xpose.msra.mxu0 0.0
        %2127 = vmatprep.subr.mxu0 0.0
        %2128 = vmatpush1.xpose.msra.mxu0 0.0
        %2129 = vmatprep.subr.mxu0 0.0
        %2130 = vmatpush1.xpose.msra.mxu0 0.0
        %2131 = vmatprep.subr.mxu0 0.0
        %2132 = vmatpush1.xpose.msra.mxu0 0.0
        %2133 = vmatprep.subr.mxu0 0.0
        %2134 = vmatpush1.xpose.msra.mxu0 0.0
        %2135 = vmatprep.subr.mxu0 0.0
        %2136 = vmatpush1.xpose.msra.mxu0 0.0
        %2137 = vmatprep.subr.mxu0 0.0
        %2138 = vmatpush1.xpose.msra.mxu0 0.0
        %2139 = vmatprep.subr.mxu0 0.0
        %2140 = vmatpush1.xpose.msra.mxu0 0.0
        %2141 = vmatprep.subr.mxu0 0.0
        %2142 = vmatpush1.xpose.msra.mxu0 0.0
        %2143 = vmatprep.subr.mxu0 0.0
        %2144 = vmatpush1.xpose.msra.mxu0 0.0
        %2145 = vmatprep.subr.mxu0 0.0
        %2146 = vmatpush1.xpose.msra.mxu0 0.0
        %2147 = vmatprep.subr.mxu0 0.0
        %2148 = vmatpush1.xpose.msra.mxu0 0.0
        %2149 = vmatprep.subr.mxu0 0.0
        %2150 = vmatpush1.xpose.msra.mxu0 0.0
        %2151 = vmatprep.subr.mxu0 0.0
        %2152 = vmatpush1.xpose.msra.mxu0 0.0
        %2153 = vmatprep.subr.mxu0 0.0
        %2154 = vmatpush1.xpose.msra.mxu0 0.0
        %2155 = vmatprep.subr.mxu0 0.0
        %2156 = vmatpush1.xpose.msra.mxu0 0.0
        %2157 = vmatprep.mubr.f32.mxu0 0.0
        %2158 = vmatmul.mubr.f32.gmra.mrb[0].mxu0 %v2043
        %v2159 = vpop.f32.mrb[0].mxu0
        %v2160 = vadd.f32 0.0, %v2159
        %v2161 = vpop.f32.mrb[0].mxu0
        %2162 = vdwg.mxu0
        %v2164 = vsel %vm1845, %v2039, 0
        %v2167 = vsel %vm1845, %v1896, 0
        %v2170 = vsel %vm1845, %v1899, 0
        %v2173 = vsel %vm1845, %v1902, 0
        %v2176 = vsel %vm1845, %v1905, 0
        %v2179 = vsel %vm1845, %v1908, 0
        %v2182 = vsel %vm1845, %v1911, 0
        %v2185 = vsel %vm1845, %v1914, 0
        %v2188 = vsel %vm1845, %v1917, 0
        %v2191 = vsel %vm1845, %v1920, 0
        %v2194 = vsel %vm1845, %v1923, 0
        %v2197 = vsel %vm1845, %v1926, 0
        %v2200 = vsel %vm1845, %v1929, 0
        %v2203 = vsel %vm1845, %v1932, 0
        %v2206 = vsel %vm1845, %v1935, 0
        %v2209 = vsel %vm1845, %v1938, 0
        %v2212 = vsel %vm1845, %v1941, 0
        %2214 = vmatprep.subr.mxu0 0.0
        %2215 = vmatpush1.xpose.msra.mxu0 %v2167
        %2216 = vmatprep.subr.mxu0 0.0
        %2217 = vmatpush1.xpose.msra.mxu0 %v2170
        %2218 = vmatprep.subr.mxu0 0.0
        %2219 = vmatpush1.xpose.msra.mxu0 %v2173
        %2220 = vmatprep.subr.mxu0 0.0
        %2221 = vmatpush1.xpose.msra.mxu0 %v2176
        %2222 = vmatprep.subr.mxu0 0.0
        %2223 = vmatpush1.xpose.msra.mxu0 %v2179
        %2224 = vmatprep.subr.mxu0 0.0
        %2225 = vmatpush1.xpose.msra.mxu0 %v2182
        %2226 = vmatprep.subr.mxu0 0.0
        %2227 = vmatpush1.xpose.msra.mxu0 %v2185
        %2228 = vmatprep.subr.mxu0 0.0
        %2229 = vmatpush1.xpose.msra.mxu0 %v2188
        %2230 = vmatprep.subr.mxu0 0.0
        %2231 = vmatpush1.xpose.msra.mxu0 %v2191
        %2232 = vmatprep.subr.mxu0 0.0
        %2233 = vmatpush1.xpose.msra.mxu0 %v2194
        %2234 = vmatprep.subr.mxu0 0.0
        %2235 = vmatpush1.xpose.msra.mxu0 %v2197
        %2236 = vmatprep.subr.mxu0 0.0
        %2237 = vmatpush1.xpose.msra.mxu0 %v2200
        %2238 = vmatprep.subr.mxu0 0.0
        %2239 = vmatpush1.xpose.msra.mxu0 %v2203
        %2240 = vmatprep.subr.mxu0 0.0
        %2241 = vmatpush1.xpose.msra.mxu0 %v2206
        %2242 = vmatprep.subr.mxu0 0.0
        %2243 = vmatpush1.xpose.msra.mxu0 %v2209
        %2244 = vmatprep.subr.mxu0 0.0
        %2245 = vmatpush1.xpose.msra.mxu0 %v2212
        %2246 = vmatprep.subr.mxu0 0.0
        %2247 = vmatpush1.xpose.msra.mxu0 0.0
        %2248 = vmatprep.subr.mxu0 0.0
        %2249 = vmatpush1.xpose.msra.mxu0 0.0
        %2250 = vmatprep.subr.mxu0 0.0
        %2251 = vmatpush1.xpose.msra.mxu0 0.0
        %2252 = vmatprep.subr.mxu0 0.0
        %2253 = vmatpush1.xpose.msra.mxu0 0.0
        %2254 = vmatprep.subr.mxu0 0.0
        %2255 = vmatpush1.xpose.msra.mxu0 0.0
        %2256 = vmatprep.subr.mxu0 0.0
        %2257 = vmatpush1.xpose.msra.mxu0 0.0
        %2258 = vmatprep.subr.mxu0 0.0
        %2259 = vmatpush1.xpose.msra.mxu0 0.0
        %2260 = vmatprep.subr.mxu0 0.0
        %2261 = vmatpush1.xpose.msra.mxu0 0.0
        %2262 = vmatprep.subr.mxu0 0.0
        %2263 = vmatpush1.xpose.msra.mxu0 0.0
        %2264 = vmatprep.subr.mxu0 0.0
        %2265 = vmatpush1.xpose.msra.mxu0 0.0
        %2266 = vmatprep.subr.mxu0 0.0
        %2267 = vmatpush1.xpose.msra.mxu0 0.0
        %2268 = vmatprep.subr.mxu0 0.0
        %2269 = vmatpush1.xpose.msra.mxu0 0.0
        %2270 = vmatprep.subr.mxu0 0.0
        %2271 = vmatpush1.xpose.msra.mxu0 0.0
        %2272 = vmatprep.subr.mxu0 0.0
        %2273 = vmatpush1.xpose.msra.mxu0 0.0
        %2274 = vmatprep.subr.mxu0 0.0
        %2275 = vmatpush1.xpose.msra.mxu0 0.0
        %2276 = vmatprep.subr.mxu0 0.0
        %2277 = vmatpush1.xpose.msra.mxu0 0.0
        %2278 = vmatprep.mubr.f32.mxu0 0.0
        %2279 = vmatmul.mubr.f32.gmra.mrb[0].mxu0 %v2164
        %v2280 = vpop.f32.mrb[0].mxu0
        %v2281 = vadd.f32 0.0, %v2280
        %v2282 = vpop.f32.mrb[0].mxu0
        %2283 = vdwg.mxu0
        %v2285 = vsel %vm1845, %v2040, 0
        %v2288 = vsel %vm1845, %v1944, 0
        %v2291 = vsel %vm1845, %v1947, 0
        %v2294 = vsel %vm1845, %v1950, 0
        %v2297 = vsel %vm1845, %v1953, 0
        %v2300 = vsel %vm1845, %v1956, 0
        %v2303 = vsel %vm1845, %v1959, 0
        %v2306 = vsel %vm1845, %v1962, 0
        %v2309 = vsel %vm1845, %v1965, 0
        %v2312 = vsel %vm1845, %v1968, 0
        %v2315 = vsel %vm1845, %v1971, 0
        %v2318 = vsel %vm1845, %v1974, 0
        %v2321 = vsel %vm1845, %v1977, 0
        %v2324 = vsel %vm1845, %v1980, 0
        %v2327 = vsel %vm1845, %v1983, 0
        %v2330 = vsel %vm1845, %v1986, 0
        %v2333 = vsel %vm1845, %v1989, 0
        %2335 = vmatprep.subr.mxu0 0.0
        %2336 = vmatpush1.xpose.msra.mxu0 %v2288
        %2337 = vmatprep.subr.mxu0 0.0
        %2338 = vmatpush1.xpose.msra.mxu0 %v2291
        %2339 = vmatprep.subr.mxu0 0.0
        %2340 = vmatpush1.xpose.msra.mxu0 %v2294
        %2341 = vmatprep.subr.mxu0 0.0
        %2342 = vmatpush1.xpose.msra.mxu0 %v2297
        %2343 = vmatprep.subr.mxu0 0.0
        %2344 = vmatpush1.xpose.msra.mxu0 %v2300
        %2345 = vmatprep.subr.mxu0 0.0
        %2346 = vmatpush1.xpose.msra.mxu0 %v2303
        %2347 = vmatprep.subr.mxu0 0.0
        %2348 = vmatpush1.xpose.msra.mxu0 %v2306
        %2349 = vmatprep.subr.mxu0 0.0
        %2350 = vmatpush1.xpose.msra.mxu0 %v2309
        %2351 = vmatprep.subr.mxu0 0.0
        %2352 = vmatpush1.xpose.msra.mxu0 %v2312
        %2353 = vmatprep.subr.mxu0 0.0
        %2354 = vmatpush1.xpose.msra.mxu0 %v2315
        %2355 = vmatprep.subr.mxu0 0.0
        %2356 = vmatpush1.xpose.msra.mxu0 %v2318
        %2357 = vmatprep.subr.mxu0 0.0
        %2358 = vmatpush1.xpose.msra.mxu0 %v2321
        %2359 = vmatprep.subr.mxu0 0.0
        %2360 = vmatpush1.xpose.msra.mxu0 %v2324
        %2361 = vmatprep.subr.mxu0 0.0
        %2362 = vmatpush1.xpose.msra.mxu0 %v2327
        %2363 = vmatprep.subr.mxu0 0.0
        %2364 = vmatpush1.xpose.msra.mxu0 %v2330
        %2365 = vmatprep.subr.mxu0 0.0
        %2366 = vmatpush1.xpose.msra.mxu0 %v2333
        %2367 = vmatprep.subr.mxu0 0.0
        %2368 = vmatpush1.xpose.msra.mxu0 0.0
        %2369 = vmatprep.subr.mxu0 0.0
        %2370 = vmatpush1.xpose.msra.mxu0 0.0
        %2371 = vmatprep.subr.mxu0 0.0
        %2372 = vmatpush1.xpose.msra.mxu0 0.0
        %2373 = vmatprep.subr.mxu0 0.0
        %2374 = vmatpush1.xpose.msra.mxu0 0.0
        %2375 = vmatprep.subr.mxu0 0.0
        %2376 = vmatpush1.xpose.msra.mxu0 0.0
        %2377 = vmatprep.subr.mxu0 0.0
        %2378 = vmatpush1.xpose.msra.mxu0 0.0
        %2379 = vmatprep.subr.mxu0 0.0
        %2380 = vmatpush1.xpose.msra.mxu0 0.0
        %2381 = vmatprep.subr.mxu0 0.0
        %2382 = vmatpush1.xpose.msra.mxu0 0.0
        %2383 = vmatprep.subr.mxu0 0.0
        %2384 = vmatpush1.xpose.msra.mxu0 0.0
        %2385 = vmatprep.subr.mxu0 0.0
        %2386 = vmatpush1.xpose.msra.mxu0 0.0
        %2387 = vmatprep.subr.mxu0 0.0
        %2388 = vmatpush1.xpose.msra.mxu0 0.0
        %2389 = vmatprep.subr.mxu0 0.0
        %2390 = vmatpush1.xpose.msra.mxu0 0.0
        %2391 = vmatprep.subr.mxu0 0.0
        %2392 = vmatpush1.xpose.msra.mxu0 0.0
        %2393 = vmatprep.subr.mxu0 0.0
        %2394 = vmatpush1.xpose.msra.mxu0 0.0
        %2395 = vmatprep.subr.mxu0 0.0
        %2396 = vmatpush1.xpose.msra.mxu0 0.0
        %2397 = vmatprep.subr.mxu0 0.0
        %2398 = vmatpush1.xpose.msra.mxu0 0.0
        %2399 = vmatprep.mubr.f32.mxu0 0.0
        %2400 = vmatmul.mubr.f32.gmra.mrb[0].mxu0 %v2285
        %v2401 = vpop.f32.mrb[0].mxu0
        %v2402 = vadd.f32 0.0, %v2401
        %v2403 = vpop.f32.mrb[0].mxu0
        %2404 = vdwg.mxu0
        %v2406 = vsel %vm1845, %v2041, 0
        %v2409 = vsel %vm1845, %v1992, 0
        %v2412 = vsel %vm1845, %v1995, 0
        %v2415 = vsel %vm1845, %v1998, 0
        %v2418 = vsel %vm1845, %v2001, 0
        %v2421 = vsel %vm1845, %v2004, 0
        %v2424 = vsel %vm1845, %v2007, 0
        %v2427 = vsel %vm1845, %v2010, 0
        %v2430 = vsel %vm1845, %v2013, 0
        %v2433 = vsel %vm1845, %v2016, 0
        %v2436 = vsel %vm1845, %v2019, 0
        %v2439 = vsel %vm1845, %v2022, 0
        %v2442 = vsel %vm1845, %v2025, 0
        %v2445 = vsel %vm1845, %v2028, 0
        %v2448 = vsel %vm1845, %v2031, 0
        %v2451 = vsel %vm1845, %v2034, 0
        %v2454 = vsel %vm1845, %v2037, 0
        %2456 = vmatprep.subr.mxu0 0.0
        %2457 = vmatpush1.xpose.msra.mxu0 %v2409
        %2458 = vmatprep.subr.mxu0 0.0
        %2459 = vmatpush1.xpose.msra.mxu0 %v2412
        %2460 = vmatprep.subr.mxu0 0.0
        %2461 = vmatpush1.xpose.msra.mxu0 %v2415
        %2462 = vmatprep.subr.mxu0 0.0
        %2463 = vmatpush1.xpose.msra.mxu0 %v2418
        %2464 = vmatprep.subr.mxu0 0.0
        %2465 = vmatpush1.xpose.msra.mxu0 %v2421
        %2466 = vmatprep.subr.mxu0 0.0
        %2467 = vmatpush1.xpose.msra.mxu0 %v2424
        %2468 = vmatprep.subr.mxu0 0.0
        %2469 = vmatpush1.xpose.msra.mxu0 %v2427
        %2470 = vmatprep.subr.mxu0 0.0
        %2471 = vmatpush1.xpose.msra.mxu0 %v2430
        %2472 = vmatprep.subr.mxu0 0.0
        %2473 = vmatpush1.xpose.msra.mxu0 %v2433
        %2474 = vmatprep.subr.mxu0 0.0
        %2475 = vmatpush1.xpose.msra.mxu0 %v2436
        %2476 = vmatprep.subr.mxu0 0.0
        %2477 = vmatpush1.xpose.msra.mxu0 %v2439
        %2478 = vmatprep.subr.mxu0 0.0
        %2479 = vmatpush1.xpose.msra.mxu0 %v2442
        %2480 = vmatprep.subr.mxu0 0.0
        %2481 = vmatpush1.xpose.msra.mxu0 %v2445
        %2482 = vmatprep.subr.mxu0 0.0
        %2483 = vmatpush1.xpose.msra.mxu0 %v2448
        %2484 = vmatprep.subr.mxu0 0.0
        %2485 = vmatpush1.xpose.msra.mxu0 %v2451
        %2486 = vmatprep.subr.mxu0 0.0
        %2487 = vmatpush1.xpose.msra.mxu0 %v2454
        %2488 = vmatprep.subr.mxu0 0.0
        %2489 = vmatpush1.xpose.msra.mxu0 0.0
        %2490 = vmatprep.subr.mxu0 0.0
        %2491 = vmatpush1.xpose.msra.mxu0 0.0
        %2492 = vmatprep.subr.mxu0 0.0
        %2493 = vmatpush1.xpose.msra.mxu0 0.0
        %2494 = vmatprep.subr.mxu0 0.0
        %2495 = vmatpush1.xpose.msra.mxu0 0.0
        %2496 = vmatprep.subr.mxu0 0.0
        %2497 = vmatpush1.xpose.msra.mxu0 0.0
        %2498 = vmatprep.subr.mxu0 0.0
        %2499 = vmatpush1.xpose.msra.mxu0 0.0
        %2500 = vmatprep.subr.mxu0 0.0
        %2501 = vmatpush1.xpose.msra.mxu0 0.0
        %2502 = vmatprep.subr.mxu0 0.0
        %2503 = vmatpush1.xpose.msra.mxu0 0.0
        %2504 = vmatprep.subr.mxu0 0.0
        %2505 = vmatpush1.xpose.msra.mxu0 0.0
        %2506 = vmatprep.subr.mxu0 0.0
        %2507 = vmatpush1.xpose.msra.mxu0 0.0
        %2508 = vmatprep.subr.mxu0 0.0
        %2509 = vmatpush1.xpose.msra.mxu0 0.0
        %2510 = vmatprep.subr.mxu0 0.0
        %2511 = vmatpush1.xpose.msra.mxu0 0.0
        %2512 = vmatprep.subr.mxu0 0.0
        %2513 = vmatpush1.xpose.msra.mxu0 0.0
        %2514 = vmatprep.subr.mxu0 0.0
        %2515 = vmatpush1.xpose.msra.mxu0 0.0
        %2516 = vmatprep.subr.mxu0 0.0
        %2517 = vmatpush1.xpose.msra.mxu0 0.0
        %2518 = vmatprep.subr.mxu0 0.0
        %2519 = vmatpush1.xpose.msra.mxu0 0.0
        %2520 = vmatprep.mubr.f32.mxu0 0.0
        %2521 = vmatmul.mubr.f32.gmra.mrb[0].mxu0 %v2406
        %v2522 = vpop.f32.mrb[0].mxu0
        %v2523 = vadd.f32 0.0, %v2522
        %v2524 = vpop.f32.mrb[0].mxu0
        %2525 = vdwg.mxu0
        %v2526 = vld [vmem:[#allocation2] sm:$0x1f]
        %vm2527 = vcmask 1044480
        %v2528 = vsel %vm2527, %v2160, 0.0
        %v2529 = vsel %vm2527, %v2281, 0.0
        %v2530 = vadd.f32 %v2528, %v2529
        %v2531 = vsel %vm2527, %v2402, 0.0
        %v2532 = vadd.f32 %v2530, %v2531
        %v2533 = vsel %vm2527, %v2523, 0.0
        %v2534 = vadd.f32 %v2532, %v2533
        %v2535 = vadd.f32 %v2526, %v2534
        %2536 = vst [vmem:[#allocation2] sm:$0x1f] %v2535
        %p2537 = scmp.eq.s32.totalorder %s27, 1
        // Predicated region
        $region37: #{tpu_custom_call.1} parent=31 // pred_check
          %p2538 = pneg %p2537
        $region38: #{tpu_custom_call.1} parent=31 // pred_check_branch
          %2540 = sbr.rel (%p2538) target = $region40
        $region39: #{tpu_custom_call.1} parent=31 // pred_region
          %v2541 = vld [vmem:[#allocation2] sm:$0x1f]
          %v2542 = vadd.f32 %v2541, 1e-08
          %v2543 = vrcp.pop %v2542
          %v2544 = vlaneseq
          %v2545 = vshrl.u32 %v2544, 7
          %v2546 = vsub.s32 4, %v2545
          %v2547 = vrot.slane %v2543, %v2546
          %v2548 = vmul.f32 %v2541, %v2547
          %2549 = vst [vmem:[%s240] sm:$0xf] %v2548
          %vm2550 = vcmp.gt.f32.partialorder %v2541, 0.0
          %v2551 = vsel %vm2550, 1, 0
          %v2552 = vcvt.s32.f32 %v2551
          %2553 = vst [vmem:[%s246 - $0x4] sm:$0x10] %v2552
        $region40: #{tpu_custom_call.1} parent=31 // pred_fallthru
          _
        %s2554 = sand.u32 %s119, 1
        %s2555 = scalar_lea.sflag [#allocation4], %s2554
        %s2556 = sand.u32 %s119, 1
        %s2557 = smul.addr %s2556, 4
        %s2558 = scalar_lea.vmem [#allocation3], %s2557
        %s2559 = sand.u32 %s145, 1
        %s2560 = scalar_lea.sflag [#allocation6], %s2559
        %s2561 = sand.u32 %s145, 1
        %s2562 = scalar_lea.vmem [#allocation5], %s2561
        // Predicated region
        $region41: #{tpu_custom_call.1} parent=31 // pred_check
          %p2563 = pneg %p129
        $region42: #{tpu_custom_call.1} parent=31 // pred_check_branch
          %2565 = sbr.rel (%p2563) target = $region44
        $region43: #{tpu_custom_call.1} parent=31 // pred_region
          %s2567 = ssub.s32 64, 64
          %2568 = vsyncadd %s2555, %s2567
          %s2569 = smul.addr %s26, 64
          %s2570 = scalar_lea.hbm %s3, %s2569
          %s2572 = sshll.u32 %s2558, 4
          %s2573 = int_to_ptr.vmem [resolvable:$true] %s2572
          %2575 = dma.vmem_to_hbm [thread:$0]  %s2573, 64, %s2570, %s2555
        $region44: #{tpu_custom_call.1} parent=31 // pred_fallthru
          _
        // Predicated region
        $region45: #{tpu_custom_call.1} parent=31 // pred_check
          %p2576 = pneg %p155
        $region46: #{tpu_custom_call.1} parent=31 // pred_check_branch
          %2578 = sbr.rel (%p2576) target = $region48
        $region47: #{tpu_custom_call.1} parent=31 // pred_region
          %s2580 = ssub.s32 16, 16
          %2581 = vsyncadd %s2560, %s2580
          %s2582 = smul.addr %s26, 16
          %s2583 = scalar_lea.hbm %s4, %s2582
          %s2585 = sshll.u32 %s2562, 4
          %s2586 = int_to_ptr.vmem [resolvable:$true] %s2585
          %2588 = dma.vmem_to_hbm [thread:$0]  %s2586, 16, %s2583, %s2560
        $region48: #{tpu_custom_call.1} parent=31 // pred_fallthru
          _
      $region32: #{tpu_custom_call.1} parent=5 // pred_fallthru
        _
      %p2589 = scmp.le.s32.totalorder 2, %s17
      // Predicated region
      $region49: #{tpu_custom_call.1} parent=5 // pred_check
        %p2590 = pneg %p2589
      $region50: #{tpu_custom_call.1} parent=5 // pred_check_branch
        %2592 = sbr.rel (%p2590) target = $region52
      $region51: #{tpu_custom_call.1} parent=5 // pred_region
        %s2593 = ssub.s32 %s17, 2
        // Predicated region
        $region53: #{tpu_custom_call.1} parent=51 // pred_check
          %p2594 = pneg %p135
        $region54: #{tpu_custom_call.1} parent=51 // pred_check_branch
          %2596 = sbr.rel (%p2594) target = $region56
        $region55: #{tpu_custom_call.1} parent=51 // pred_region
          %s2597 = sand.u32 %s120, 1
          %s2598 = scalar_lea.sflag [#allocation4], %s2597
          %s2599 = sand.u32 %s120, 1
          %s2600 = smul.addr %s2599, 4
          %s2601 = scalar_lea.vmem [#allocation3], %s2600
          %2602 = dma.done %s2598, 64
        $region56: #{tpu_custom_call.1} parent=51 // pred_fallthru
          _
        // Predicated region
        $region57: #{tpu_custom_call.1} parent=51 // pred_check
          %p2603 = pneg %p161
        $region58: #{tpu_custom_call.1} parent=51 // pred_check_branch
          %2605 = sbr.rel (%p2603) target = $region60
        $region59: #{tpu_custom_call.1} parent=51 // pred_region
          %s2606 = sand.u32 %s146, 1
          %s2607 = scalar_lea.sflag [#allocation6], %s2606
          %s2608 = sand.u32 %s146, 1
          %s2609 = scalar_lea.vmem [#allocation5], %s2608
          %2610 = dma.done %s2607, 16
        $region60: #{tpu_custom_call.1} parent=51 // pred_fallthru
          _
      $region52: #{tpu_custom_call.1} parent=5 // pred_fallthru
        _
    $region6: #{tpu_custom_call.1} parent=1 // loop_footer
      %s21 = sadd.s32 1, %s17
    $region7: #{tpu_custom_call.1} parent=1 // loop_footer_branch
      %16 = sbr.rel target = $region3
    $region8: #{tpu_custom_call.1} parent=1 // loop_exit
      _
    %2611 = vsyncpa [#allocation4], 1
    %s2612 = scalar_lea.sflag [#allocation4], 1
    %2613 = vsyncpa %s2612, 1
    %2614 = vsyncpa [#allocation6], 1
    %s2615 = scalar_lea.sflag [#allocation6], 1
    %2616 = vsyncpa %s2615, 1

</llo_original>
